<compile_context>
chip_gen: v7x
topology: tpu7x:2x2x1
jax: 0.10.0
libtpu: 0.0.40
codegen_flags: <defaults>
</compile_context>

<pallas_src>
import functools
import math

import numpy as np

import jax
import jax.numpy as jnp
from jax.experimental import pallas as pl
from jax.experimental.pallas import tpu as pltpu

# ---- configuration (small, consistent with the module's __init__) ----------
HIDDEN = 32          # hidden_dims
NUM_HEADS = 4        # num_heads
DIM_FF = 64          # dim_feedforward
L_SEARCH = 8         # search sequence length
S_MEM = 8            # memory (template) sequence length
BATCH = 2
EPS = 1e-5           # nn.LayerNorm default eps
HEAD_DIM = HIDDEN // NUM_HEADS

# ---- weight-slab row offsets (all multiples of 16 -> bf16-tile aligned) -----
_W_QKK = 0                       # (E, 3E)  fused [sa_wq*scale | sa_wk | ca_wk]
_W_SA_V = _W_QKK + HIDDEN        # (E, E)
_W_SA_OT = _W_SA_V + HIDDEN      # (E, E)   sa out-proj, TRANSPOSED (out, in)
_W_CA_Q = _W_SA_OT + HIDDEN      # (E, E)   pre-scaled
_W_CA_V = _W_CA_Q + HIDDEN       # (E, E)
_W_CA_OT = _W_CA_V + HIDDEN      # (E, E)   ca out-proj, TRANSPOSED (out, in)
_W_FF1 = _W_CA_OT + HIDDEN       # (E, F)
_W_FF2 = _W_FF1 + HIDDEN         # (F, E)
_W_ROWS = _W_FF2 + DIM_FF        # 288
_W_COLS = 128                    # padded to a full lane tile (perf review #3)

# ---- bias-slab entry indices (each entry pre-broadcast to R rows) -----------
(_B_QKK, _B_SA_V, _B_SA_O, _B_N1G, _B_N1B,
 _B_CA_Q, _B_CA_V, _B_CA_O, _B_N2G, _B_N2B,
 _B_FF1, _B_FF2, _B_NFG, _B_NFB) = range(14)
_B_ROWS = 14


# ------------------------------- the kernel ----------------------------------
def decoder_layer_kernel(search_ref, pos_s_ref, memory_ref, pos_t_ref,
                         mask_ss_ref, mask_ms_ref, w_ref, b_ref, out_ref,
                         *, num_heads, bias_rows):
    E = HIDDEN
    D = E // num_heads
    Rs = search_ref.shape[0]     # search rows in this block  (= G * L * N)
    Rm = memory_ref.shape[0]     # memory rows in this block  (= G * S * N)

    def bias(idx, rows, width):
        # Pre-broadcast bias slab: entry `idx` occupies `bias_rows` rows.
        r0 = idx * bias_rows
        return b_ref[r0:r0 + rows, 0:width]

    def mm(x, w):
        # bf16 operands (MXU-native on every generation), f32 accumulation.
        return jnp.dot(x.astype(jnp.bfloat16), w,
                       preferred_element_type=jnp.float32)

    def layernorm(x, g_idx, b_idx):
        rows = x.shape[0]
        g = bias(g_idx, rows, E)
        bb = bias(b_idx, rows, E)
        # var = E[x^2] - mu^2: the two XLU reductions are independent
        # (de-serialized), and g*rsqrt is folded into one scale.
        mu = jnp.mean(x, axis=-1, keepdims=True)
        ms = jnp.mean(x * x, axis=-1, keepdims=True)
        inv = jax.lax.rsqrt(ms - mu * mu + EPS)
        return (x - mu) * (g * inv) + bb

    def attention(Q, K, V, mask, woT, bo):
        """Multi-head attention with a precomputed additive (problem,batch) mask.

        Q: (RQ, E) - softmax scale already folded into the Q projection.
        K/V: (RK, E).  woT: (E_out, E_in) transposed output projection so that
        each head's weight block is a cheap lane slice.  Per-head outputs are
        accumulated directly through the output projection (no lane concat).
        """
        Qb = Q.astype(jnp.bfloat16)
        Kb = K.astype(jnp.bfloat16)
        Vb = V.astype(jnp.bfloat16)
        o = None
        for h in range(num_heads):
            sl = slice(h * D, (h + 1) * D)
            s = jax.lax.dot_general(
                Qb[:, sl], Kb[:, sl], (((1,), (1,)), ((), ())),
                preferred_element_type=jnp.float32) + mask
            s = s - jnp.max(s, axis=-1, keepdims=True)
            p = jnp.exp(s)
            l = jnp.sum(p, axis=-1, keepdims=True)
            p = p * pl.reciprocal(l, approx=True)        # EUP slot, off VALU path
            oh = jnp.dot(p.astype(jnp.bfloat16), Vb[:, sl],
                         preferred_element_type=jnp.float32)
            contrib = jax.lax.dot_general(
                oh.astype(jnp.bfloat16), woT[:, sl], (((1,), (1,)), ((), ())),
                preferred_element_type=jnp.float32)
            o = contrib if o is None else o + contrib
        return o + bo

    search = search_ref[...]                      # (Rs, E)
    q = search + pos_s_ref[...]                   # (Rs, E)
    q2 = memory_ref[...] + pos_t_ref[...]         # (Rm, E)
    mask_ss = mask_ss_ref[...]                    # (Rs, Rs) trace-time constant
    mask_ms = mask_ms_ref[...]                    # (Rm, Rs)

    # --- fused projection of q: [Q_self (pre-scaled) | K_self | K_cross | 0] --
    qkk = mm(q, w_ref[_W_QKK:_W_QKK + E, :]) + bias(_B_QKK, Rs, _W_COLS)
    q_sa = qkk[:, 0:E]
    k_sa = qkk[:, E:2 * E]
    k_ca = qkk[:, 2 * E:3 * E]

    # --- self attention: q = k = search + pos_search, value = search ---------
    v_sa = mm(search, w_ref[_W_SA_V:_W_SA_V + E, 0:E]) + bias(_B_SA_V, Rs, E)
    search2 = attention(q_sa, k_sa, v_sa, mask_ss,
                        w_ref[_W_SA_OT:_W_SA_OT + E, 0:E],
                        bias(_B_SA_O, Rs, E))
    # dropout1 == identity (eval)
    search_n = layernorm(search + search2, _B_N1G, _B_N1B)

    # --- cross attention: query = memory + pos_template,
    #                      key   = q (pre-norm search + pos_search),
    #                      value = normalized search ---------------------------
    q_ca = mm(q2, w_ref[_W_CA_Q:_W_CA_Q + E, 0:E]) + bias(_B_CA_Q, Rm, E)
    v_ca = mm(search_n, w_ref[_W_CA_V:_W_CA_V + E, 0:E]) + bias(_B_CA_V, Rs, E)
    t2 = attention(q_ca, k_ca, v_ca, mask_ms,
                   w_ref[_W_CA_OT:_W_CA_OT + E, 0:E],
                   bias(_B_CA_O, Rm, E))
    # dropout2 == identity (eval)
    t = layernorm(q2 + t2, _B_N2G, _B_N2B)

    # --- feed forward: Linear -> ReLU -> Linear (dropouts identity) ----------
    hdn = jnp.maximum(
        mm(t, w_ref[_W_FF1:_W_FF1 + E, 0:DIM_FF]) + bias(_B_FF1, Rm, DIM_FF),
        0.0)
    ff = mm(hdn, w_ref[_W_FF2:_W_FF2 + DIM_FF, 0:E]) + bias(_B_FF2, Rm, E)
    out_ref[...] = layernorm(t + ff, _B_NFG, _B_NFB)


# --------------------- trace-time constant attention mask --------------------
def _block_mask(n_problems, rows_q, rows_k, nbatch):
    """Additive mask (0 / -1e30): query row attends to key row iff they belong
    to the same stacked problem AND the same batch element (rows are seq-major,
    batch-minor within each problem)."""
    qi = np.arange(n_problems * rows_q)
    ki = np.arange(n_problems * rows_k)
    same_prob = (qi[:, None] // rows_q) == (ki[None, :] // rows_k)
    same_batch = (qi[:, None] % nbatch) == (ki[None, :] % nbatch)
    return np.where(same_prob & same_batch, 0.0, -1e30).astype(np.float32)


# ------------------------------ wrappers --------------------------------------
@functools.partial(jax.jit, static_argnames=("problems_per_block",))
def transformer_decoder_layer_stacked(search, memory, pos_search, pos_template,
                                      w_slab, b_slab, problems_per_block=1):
    """K independent problems: search/pos_search (K, L, N, E),
    memory/pos_template (K, S, N, E) -> (K, S, N, E).

    `problems_per_block` problems are fused (row-stacked) per grid step; the
    grid axis over blocks is "parallel" so v7x's second TensorCore is used."""
    K, L, N, E = search.shape
    S = memory.shape[1]
    G = problems_per_block
    assert K % G == 0, (K, G)
    Rs = G * L * N                    # search rows per grid step
    Rm = G * S * N                    # memory rows per grid step
    RB = max(Rs, Rm)                  # bias broadcast row count

    # Row-fuse: (K, L, N, E) -> (K*L*N, E); seq-major, batch-minor per problem.
    s_rows = search.reshape(K * L * N, E)
    ps_rows = pos_search.reshape(K * L * N, E)
    m_rows = memory.reshape(K * S * N, E)
    pt_rows = pos_template.reshape(K * S * N, E)

    # Pre-broadcast biases / LN params to the block row count (wrapper-side
    # layout plumbing; removes in-kernel sublane-broadcast relayouts).
    n_b, C = b_slab.shape
    b_big = jnp.broadcast_to(b_slab[:, None, :], (n_b, RB, C)).reshape(n_b * RB, C)

    # Trace-time numpy constants (shapes are static) - no in-kernel iota/mod.
    mask_ss = jnp.asarray(_block_mask(G, L * N, L * N, N))
    mask_ms = jnp.asarray(_block_mask(G, S * N, L * N, N))

    kernel = functools.partial(decoder_layer_kernel,
                               num_heads=NUM_HEADS, bias_rows=RB)

    row_spec_s = pl.BlockSpec((Rs, E), lambda p: (p, 0))
    row_spec_m = pl.BlockSpec((Rm, E), lambda p: (p, 0))

    def full_spec(a):
        return pl.BlockSpec(a.shape, lambda p: (0, 0))

    out = pl.pallas_call(
        kernel,
        out_shape=jax.ShapeDtypeStruct((K * S * N, E), jnp.float32),
        grid=(K // G,),
        in_specs=[row_spec_s, row_spec_s, row_spec_m, row_spec_m,
                  full_spec(mask_ss), full_spec(mask_ms),
                  full_spec(w_slab), full_spec(b_big)],
        out_specs=row_spec_m,
        compiler_params=pltpu.CompilerParams(
            dimension_semantics=("parallel",)),
    )(s_rows, ps_rows, m_rows, pt_rows, mask_ss, mask_ms, w_slab, b_big)

    return out.reshape(K, S, N, E)


def transformer_decoder_layer(search, memory, pos_search, pos_template,
                              w_slab, b_slab):
    """Single problem, exactly the module's signature:
    search/pos_search (L, N, E), memory/pos_template (S, N, E) -> (S, N, E)."""
    out = transformer_decoder_layer_stacked(
        search[None], memory[None], pos_search[None], pos_template[None],
        w_slab, b_slab, problems_per_block=1)
    return out[0]


# ------------------------- deterministic parameters ---------------------------
def init_params(key, hidden, dim_ff):
    ks = iter(jax.random.split(key, 32))

    def q_bf16(a):
        # Round params to bf16-representable values so the bf16-MXU kernel and
        # the f32 reference share identical parameters.
        return a.astype(jnp.bfloat16).astype(jnp.float32)

    def lin_w(fan_in, fan_out):
        # stored pre-transposed so projection is x @ W
        return q_bf16(jax.random.normal(next(ks), (fan_in, fan_out), jnp.float32)
                      * (1.0 / math.sqrt(fan_in)))

    def bias(n):
        return q_bf16(jax.random.normal(next(ks), (1, n), jnp.float32) * 0.02)

    p = {}
    for pre in ("sa", "ca"):  # self-attn / cross-attn (in_proj split + out_proj)
        p[pre + "_wq"] = lin_w(hidden, hidden)
        p[pre + "_bq"] = bias(hidden)
        p[pre + "_wk"] = lin_w(hidden, hidden)
        p[pre + "_bk"] = bias(hidden)
        p[pre + "_wv"] = lin_w(hidden, hidden)
        p[pre + "_bv"] = bias(hidden)
        p[pre + "_wo"] = lin_w(hidden, hidden)
        p[pre + "_bo"] = bias(hidden)
    for pre in ("n1", "n2", "nf"):  # LayerNorms
        p[pre + "_g"] = jnp.ones((1, hidden), jnp.float32)
        p[pre + "_b"] = jnp.zeros((1, hidden), jnp.float32)
    p["ff_w1"] = lin_w(hidden, dim_ff)
    p["ff_b1"] = bias(dim_ff)
    p["ff_w2"] = lin_w(dim_ff, hidden)
    p["ff_b2"] = bias(hidden)
    return p


def pack_params(p):
    """One-time host-side packing: bf16 weight slab (128 lanes), f32 bias slab,
    softmax-scale folding, transposed output projections."""
    E = HIDDEN
    scale = 1.0 / math.sqrt(HEAD_DIM)
    W = _W_COLS  # 128

    def pad_cols(w):
        return jnp.pad(w, ((0, 0), (0, W - w.shape[1])))

    w_qkk = jnp.concatenate([p["sa_wq"] * scale, p["sa_wk"], p["ca_wk"]],
                            axis=1)                                  # (E, 3E)
    w_slab = jnp.concatenate([
        pad_cols(w_qkk),
        pad_cols(p["sa_wv"]),
        pad_cols(p["sa_wo"].T),       # transposed: per-head block = lane slice
        pad_cols(p["ca_wq"] * scale),
        pad_cols(p["ca_wv"]),
        pad_cols(p["ca_wo"].T),
        pad_cols(p["ff_w1"]),
        pad_cols(p["ff_w2"]),
    ], axis=0).astype(jnp.bfloat16)
    assert w_slab.shape == (_W_ROWS, _W_COLS), w_slab.shape

    def row(v):
        v2 = v.reshape(1, -1)
        return jnp.pad(v2, ((0, 0), (0, W - v2.shape[1])))

    b_qkk = jnp.concatenate([p["sa_bq"] * scale, p["sa_bk"], p["ca_bk"]],
                            axis=1)                                  # (1, 3E)
    b_slab = jnp.concatenate([
        row(b_qkk), row(p["sa_bv"]), row(p["sa_bo"]),
        row(p["n1_g"]), row(p["n1_b"]),
        row(p["ca_bq"] * scale), row(p["ca_bv"]), row(p["ca_bo"]),
        row(p["n2_g"]), row(p["n2_b"]),
        row(p["ff_b1"]), row(p["ff_b2"]),
        row(p["nf_g"]), row(p["nf_b"]),
    ], axis=0)
    assert b_slab.shape == (_B_ROWS, _W_COLS), b_slab.shape
    return w_slab, b_slab


# ---------------------------- pure-JAX reference ------------------------------
def _reference_single(search, memory, pos_s, pos_t, p):
    def mha(q_in, k_in, v_in, pre):
        Q = q_in @ p[pre + "_wq"] + p[pre + "_bq"][0]
        K = k_in @ p[pre + "_wk"] + p[pre + "_bk"][0]
        V = v_in @ p[pre + "_wv"] + p[pre + "_bv"][0]
        d = HIDDEN // NUM_HEADS
        Qh = Q.reshape(-1, NUM_HEADS, d).transpose(1, 0, 2)
        Kh = K.reshape(-1, NUM_HEADS, d).transpose(1, 0, 2)
        Vh = V.reshape(-1, NUM_HEADS, d).transpose(1, 0, 2)
        s = jnp.einsum("hqd,hkd->hqk", Qh, Kh) / math.sqrt(d)
        a = jax.nn.softmax(s, axis=-1)
        o = jnp.einsum("hqk,hkd->hqd", a, Vh).transpose(1, 0, 2).reshape(-1, HIDDEN)
        return o @ p[pre + "_wo"] + p[pre + "_bo"][0]

    def ln(x, g, b):
        mu = x.mean(-1, keepdims=True)
        var = ((x - mu) ** 2).mean(-1, keepdims=True)
        return (x - mu) / jnp.sqrt(var + EPS) * g[0] + b[0]

    q = search + pos_s
    s2 = mha(q, q, search, "sa")
    sn = ln(search + s2, p["n1_g"], p["n1_b"])
    q2 = memory + pos_t
    t2 = mha(q2, q, sn, "ca")
    t = ln(q2 + t2, p["n2_g"], p["n2_b"])
    h = jax.nn.relu(t @ p["ff_w1"] + p["ff_b1"][0])
    ff = h @ p["ff_w2"] + p["ff_b2"][0]
    return ln(t + ff, p["nf_g"], p["nf_b"])


def reference(search, memory, pos_s, pos_t, params):
    f = jax.vmap(lambda s, m, a, b: _reference_single(s, m, a, b, params),
                 in_axes=(1, 1, 1, 1), out_axes=1)
    return f(search, memory, pos_s, pos_t)


# ----------------------------------- main -------------------------------------
if __name__ == "__main__":
    key = jax.random.PRNGKey(0)
    k1, k2, k3, k4, k5, kp = jax.random.split(key, 6)

    params = init_params(kp, HIDDEN, DIM_FF)
    w_slab, b_slab = pack_params(params)

    # bf16 MXU operands + approx-reciprocal softmax (per perf review) mean the
    # kernel is compared against the f32 reference at a loosened tolerance
    # (the all-f32 variant of this kernel matched at 1e-4).
    TOL = 5e-2

    # --- 1) single forward, exactly the module's shapes ----------------------
    search = jax.random.normal(k1, (L_SEARCH, BATCH, HIDDEN), jnp.float32)
    memory = jax.random.normal(k2, (S_MEM, BATCH, HIDDEN), jnp.float32)
    pos_search = jax.random.normal(k3, (L_SEARCH, BATCH, HIDDEN), jnp.float32)
    pos_template = jax.random.normal(k4, (S_MEM, BATCH, HIDDEN), jnp.float32)

    out = transformer_decoder_layer(search, memory, pos_search, pos_template,
                                    w_slab, b_slab)
    out = jax.block_until_ready(out)
    ref = reference(search, memory, pos_search, pos_template, params)
    assert out.shape == (S_MEM, BATCH, HIDDEN), out.shape
    assert jnp.allclose(out, ref, atol=TOL, rtol=TOL), \
        float(jnp.max(jnp.abs(out - ref)))

    # --- 2) stacked forward: 4 independent problems, 2 fused per grid step ---
    # demonstrates row-stacking (amortizes launch/DMA overhead) and the
    # "parallel" grid axis (second TensorCore on v7x).
    K = 4
    kk = jax.random.split(k5, 4)
    searches = jax.random.normal(kk[0], (K, L_SEARCH, BATCH, HIDDEN), jnp.float32)
    memories = jax.random.normal(kk[1], (K, S_MEM, BATCH, HIDDEN), jnp.float32)
    pos_ss = jax.random.normal(kk[2], (K, L_SEARCH, BATCH, HIDDEN), jnp.float32)
    pos_ts = jax.random.normal(kk[3], (K, S_MEM, BATCH, HIDDEN), jnp.float32)

    out_k = transformer_decoder_layer_stacked(searches, memories, pos_ss, pos_ts,
                                              w_slab, b_slab,
                                              problems_per_block=2)
    out_k = jax.block_until_ready(out_k)
    ref_k = jnp.stack([reference(searches[i], memories[i], pos_ss[i], pos_ts[i],
                                 params) for i in range(K)])
    assert out_k.shape == (K, S_MEM, BATCH, HIDDEN), out_k.shape
    assert jnp.allclose(out_k, ref_k, atol=TOL, rtol=TOL), \
        float(jnp.max(jnp.abs(out_k - ref_k)))

    print("KERNEL_OK")
</pallas_src>

<mosaic_0001>
module attributes {stable_mosaic.version = 11 : i64} {
  func.func @decoder_layer_kernel(%arg0: i32, %arg1: memref<16x32xf32, #tpu.memory_space<vmem>>, %arg2: memref<16x32xf32, #tpu.memory_space<vmem>>, %arg3: memref<16x32xf32, #tpu.memory_space<vmem>>, %arg4: memref<16x32xf32, #tpu.memory_space<vmem>>, %arg5: memref<16x16xf32, #tpu.memory_space<vmem>>, %arg6: memref<16x16xf32, #tpu.memory_space<vmem>>, %arg7: memref<288x128xbf16, #tpu.memory_space<vmem>>, %arg8: memref<224x128xf32, #tpu.memory_space<vmem>>, %arg9: memref<16x32xf32, #tpu.memory_space<vmem>>) attributes {dimension_semantics = [#tpu.dimension_semantics<parallel>], iteration_bounds = array<i64: 1>, scalar_prefetch = 0 : i64, scratch_operands = 0 : i64, tpu.core_type = #tpu.core_type<tc>, window_params = [{transform_indices = @transform_0, window_bounds = array<i64: 16, 32>}, {transform_indices = @transform_1, window_bounds = array<i64: 16, 32>}, {transform_indices = @transform_2, window_bounds = array<i64: 16, 32>}, {transform_indices = @transform_3, window_bounds = array<i64: 16, 32>}, {pipeline_mode = #tpu.pipeline_mode<synchronous>, transform_indices = @transform_4, window_bounds = array<i64: 16, 16>}, {pipeline_mode = #tpu.pipeline_mode<synchronous>, transform_indices = @transform_5, window_bounds = array<i64: 16, 16>}, {pipeline_mode = #tpu.pipeline_mode<synchronous>, transform_indices = @transform_6, window_bounds = array<i64: 288, 128>}, {pipeline_mode = #tpu.pipeline_mode<synchronous>, transform_indices = @transform_7, window_bounds = array<i64: 224, 128>}, {transform_indices = @transform_8, window_bounds = array<i64: 16, 32>}]} {
    %c0 = arith.constant 0 : index
    %c0_0 = arith.constant 0 : index
    %0 = vector.load %arg1[%c0, %c0_0] : memref<16x32xf32, #tpu.memory_space<vmem>>, vector<16x32xf32>
    %c0_1 = arith.constant 0 : index
    %c0_2 = arith.constant 0 : index
    %1 = vector.load %arg2[%c0_1, %c0_2] : memref<16x32xf32, #tpu.memory_space<vmem>>, vector<16x32xf32>
    %2 = arith.addf %0, %1 : vector<16x32xf32>
    %c0_3 = arith.constant 0 : index
    %c0_4 = arith.constant 0 : index
    %3 = vector.load %arg3[%c0_3, %c0_4] : memref<16x32xf32, #tpu.memory_space<vmem>>, vector<16x32xf32>
    %c0_5 = arith.constant 0 : index
    %c0_6 = arith.constant 0 : index
    %4 = vector.load %arg4[%c0_5, %c0_6] : memref<16x32xf32, #tpu.memory_space<vmem>>, vector<16x32xf32>
    %5 = arith.addf %3, %4 : vector<16x32xf32>
    %c0_7 = arith.constant 0 : index
    %c0_8 = arith.constant 0 : index
    %6 = vector.load %arg5[%c0_7, %c0_8] : memref<16x16xf32, #tpu.memory_space<vmem>>, vector<16x16xf32>
    %c0_9 = arith.constant 0 : index
    %c0_10 = arith.constant 0 : index
    %7 = vector.load %arg6[%c0_9, %c0_10] : memref<16x16xf32, #tpu.memory_space<vmem>>, vector<16x16xf32>
    %c0_11 = arith.constant 0 : index
    %c0_12 = arith.constant 0 : index
    %8 = vector.load %arg7[%c0_11, %c0_12] : memref<288x128xbf16, #tpu.memory_space<vmem>>, vector<32x128xbf16>
    %9 = arith.truncf %2 : vector<16x32xf32> to vector<16x32xbf16>
    %cst = arith.constant dense<0.000000e+00> : vector<16x128xf32>
    %10 = tpu.matmul %9, %8, %cst {dimension_numbers = #tpu.dot_dimension_numbers<[1], [0], [0], [1], [0, 0, 1, 1], [], []>} : vector<16x32xbf16>, vector<32x128xbf16>, vector<16x128xf32> -> vector<16x128xf32>
    %c0_13 = arith.constant 0 : index
    %c0_14 = arith.constant 0 : index
    %11 = vector.load %arg8[%c0_13, %c0_14] : memref<224x128xf32, #tpu.memory_space<vmem>>, vector<16x128xf32>
    %12 = arith.addf %10, %11 : vector<16x128xf32>
    %13 = vector.extract_strided_slice %12 {offsets = [0, 0], sizes = [16, 32], strides = [1, 1]} : vector<16x128xf32> to vector<16x32xf32>
    %14 = vector.extract_strided_slice %12 {offsets = [0, 32], sizes = [16, 32], strides = [1, 1]} : vector<16x128xf32> to vector<16x32xf32>
    %15 = vector.extract_strided_slice %12 {offsets = [0, 64], sizes = [16, 32], strides = [1, 1]} : vector<16x128xf32> to vector<16x32xf32>
    %c32 = arith.constant 32 : index
    %c0_15 = arith.constant 0 : index
    %16 = vector.load %arg7[%c32, %c0_15] : memref<288x128xbf16, #tpu.memory_space<vmem>>, vector<32x32xbf16>
    %17 = arith.truncf %0 : vector<16x32xf32> to vector<16x32xbf16>
    %cst_16 = arith.constant dense<0.000000e+00> : vector<16x32xf32>
    %18 = tpu.matmul %17, %16, %cst_16 {dimension_numbers = #tpu.dot_dimension_numbers<[1], [0], [0], [1], [0, 0, 1, 1], [], []>} : vector<16x32xbf16>, vector<32x32xbf16>, vector<16x32xf32> -> vector<16x32xf32>
    %c16 = arith.constant 16 : index
    %c0_17 = arith.constant 0 : index
    %19 = vector.load %arg8[%c16, %c0_17] : memref<224x128xf32, #tpu.memory_space<vmem>>, vector<16x32xf32>
    %20 = arith.addf %18, %19 : vector<16x32xf32>
    %c64 = arith.constant 64 : index
    %c0_18 = arith.constant 0 : index
    %21 = vector.load %arg7[%c64, %c0_18] : memref<288x128xbf16, #tpu.memory_space<vmem>>, vector<32x32xbf16>
    %c32_19 = arith.constant 32 : index
    %c0_20 = arith.constant 0 : index
    %22 = vector.load %arg8[%c32_19, %c0_20] : memref<224x128xf32, #tpu.memory_space<vmem>>, vector<16x32xf32>
    %23 = arith.truncf %13 : vector<16x32xf32> to vector<16x32xbf16>
    %24 = arith.truncf %14 : vector<16x32xf32> to vector<16x32xbf16>
    %25 = arith.truncf %20 : vector<16x32xf32> to vector<16x32xbf16>
    %26 = vector.extract_strided_slice %23 {offsets = [0, 0], sizes = [16, 8], strides = [1, 1]} : vector<16x32xbf16> to vector<16x8xbf16>
    %27 = vector.extract_strided_slice %24 {offsets = [0, 0], sizes = [16, 8], strides = [1, 1]} : vector<16x32xbf16> to vector<16x8xbf16>
    %cst_21 = arith.constant dense<0.000000e+00> : vector<16x16xf32>
    %28 = tpu.matmul %26, %27, %cst_21 {dimension_numbers = #tpu.dot_dimension_numbers<[1], [1], [0], [0], [0, 0, 1, 0], [], []>} : vector<16x8xbf16>, vector<16x8xbf16>, vector<16x16xf32> -> vector<16x16xf32>
    %29 = arith.addf %28, %6 : vector<16x16xf32>
    %cst_22 = arith.constant dense<0xFF800000> : vector<16xf32>
    %30 = vector.multi_reduction <maximumf>, %29, %cst_22 [1] : vector<16x16xf32> to vector<16xf32>
    %31 = vector.shape_cast %30 : vector<16xf32> to vector<16x1xf32>
    %32 = vector.broadcast %31 : vector<16x1xf32> to vector<16x16xf32>
    %33 = arith.subf %29, %32 : vector<16x16xf32>
    %34 = math.exp %33 : vector<16x16xf32>
    %cst_23 = arith.constant dense<0.000000e+00> : vector<16xf32>
    %35 = vector.multi_reduction <add>, %34, %cst_23 [1] : vector<16x16xf32> to vector<16xf32>
    %36 = vector.shape_cast %35 : vector<16xf32> to vector<16x1xf32>
    %37 = tpu.reciprocal %36 {approx = true} : vector<16x1xf32> -> vector<16x1xf32>
    %38 = vector.broadcast %37 : vector<16x1xf32> to vector<16x16xf32>
    %39 = arith.mulf %34, %38 : vector<16x16xf32>
    %40 = arith.truncf %39 : vector<16x16xf32> to vector<16x16xbf16>
    %41 = vector.extract_strided_slice %25 {offsets = [0, 0], sizes = [16, 8], strides = [1, 1]} : vector<16x32xbf16> to vector<16x8xbf16>
    %cst_24 = arith.constant dense<0.000000e+00> : vector<16x8xf32>
    %42 = tpu.matmul %40, %41, %cst_24 {dimension_numbers = #tpu.dot_dimension_numbers<[1], [0], [0], [1], [0, 0, 1, 1], [], []>} : vector<16x16xbf16>, vector<16x8xbf16>, vector<16x8xf32> -> vector<16x8xf32>
    %43 = arith.truncf %42 : vector<16x8xf32> to vector<16x8xbf16>
    %44 = vector.extract_strided_slice %21 {offsets = [0, 0], sizes = [32, 8], strides = [1, 1]} : vector<32x32xbf16> to vector<32x8xbf16>
    %cst_25 = arith.constant dense<0.000000e+00> : vector<16x32xf32>
    %45 = tpu.matmul %43, %44, %cst_25 {dimension_numbers = #tpu.dot_dimension_numbers<[1], [1], [0], [0], [0, 0, 1, 0], [], []>} : vector<16x8xbf16>, vector<32x8xbf16>, vector<16x32xf32> -> vector<16x32xf32>
    %46 = vector.extract_strided_slice %23 {offsets = [0, 8], sizes = [16, 8], strides = [1, 1]} : vector<16x32xbf16> to vector<16x8xbf16>
    %47 = vector.extract_strided_slice %24 {offsets = [0, 8], sizes = [16, 8], strides = [1, 1]} : vector<16x32xbf16> to vector<16x8xbf16>
    %cst_26 = arith.constant dense<0.000000e+00> : vector<16x16xf32>
    %48 = tpu.matmul %46, %47, %cst_26 {dimension_numbers = #tpu.dot_dimension_numbers<[1], [1], [0], [0], [0, 0, 1, 0], [], []>} : vector<16x8xbf16>, vector<16x8xbf16>, vector<16x16xf32> -> vector<16x16xf32>
    %49 = arith.addf %48, %6 : vector<16x16xf32>
    %cst_27 = arith.constant dense<0xFF800000> : vector<16xf32>
    %50 = vector.multi_reduction <maximumf>, %49, %cst_27 [1] : vector<16x16xf32> to vector<16xf32>
    %51 = vector.shape_cast %50 : vector<16xf32> to vector<16x1xf32>
    %52 = vector.broadcast %51 : vector<16x1xf32> to vector<16x16xf32>
    %53 = arith.subf %49, %52 : vector<16x16xf32>
    %54 = math.exp %53 : vector<16x16xf32>
    %cst_28 = arith.constant dense<0.000000e+00> : vector<16xf32>
    %55 = vector.multi_reduction <add>, %54, %cst_28 [1] : vector<16x16xf32> to vector<16xf32>
    %56 = vector.shape_cast %55 : vector<16xf32> to vector<16x1xf32>
    %57 = tpu.reciprocal %56 {approx = true} : vector<16x1xf32> -> vector<16x1xf32>
    %58 = vector.broadcast %57 : vector<16x1xf32> to vector<16x16xf32>
    %59 = arith.mulf %54, %58 : vector<16x16xf32>
    %60 = arith.truncf %59 : vector<16x16xf32> to vector<16x16xbf16>
    %61 = vector.extract_strided_slice %25 {offsets = [0, 8], sizes = [16, 8], strides = [1, 1]} : vector<16x32xbf16> to vector<16x8xbf16>
    %cst_29 = arith.constant dense<0.000000e+00> : vector<16x8xf32>
    %62 = tpu.matmul %60, %61, %cst_29 {dimension_numbers = #tpu.dot_dimension_numbers<[1], [0], [0], [1], [0, 0, 1, 1], [], []>} : vector<16x16xbf16>, vector<16x8xbf16>, vector<16x8xf32> -> vector<16x8xf32>
    %63 = arith.truncf %62 : vector<16x8xf32> to vector<16x8xbf16>
    %64 = vector.extract_strided_slice %21 {offsets = [0, 8], sizes = [32, 8], strides = [1, 1]} : vector<32x32xbf16> to vector<32x8xbf16>
    %cst_30 = arith.constant dense<0.000000e+00> : vector<16x32xf32>
    %65 = tpu.matmul %63, %64, %cst_30 {dimension_numbers = #tpu.dot_dimension_numbers<[1], [1], [0], [0], [0, 0, 1, 0], [], []>} : vector<16x8xbf16>, vector<32x8xbf16>, vector<16x32xf32> -> vector<16x32xf32>
    %66 = arith.addf %45, %65 : vector<16x32xf32>
    %67 = vector.extract_strided_slice %23 {offsets = [0, 16], sizes = [16, 8], strides = [1, 1]} : vector<16x32xbf16> to vector<16x8xbf16>
    %68 = vector.extract_strided_slice %24 {offsets = [0, 16], sizes = [16, 8], strides = [1, 1]} : vector<16x32xbf16> to vector<16x8xbf16>
    %cst_31 = arith.constant dense<0.000000e+00> : vector<16x16xf32>
    %69 = tpu.matmul %67, %68, %cst_31 {dimension_numbers = #tpu.dot_dimension_numbers<[1], [1], [0], [0], [0, 0, 1, 0], [], []>} : vector<16x8xbf16>, vector<16x8xbf16>, vector<16x16xf32> -> vector<16x16xf32>
    %70 = arith.addf %69, %6 : vector<16x16xf32>
    %cst_32 = arith.constant dense<0xFF800000> : vector<16xf32>
    %71 = vector.multi_reduction <maximumf>, %70, %cst_32 [1] : vector<16x16xf32> to vector<16xf32>
    %72 = vector.shape_cast %71 : vector<16xf32> to vector<16x1xf32>
    %73 = vector.broadcast %72 : vector<16x1xf32> to vector<16x16xf32>
    %74 = arith.subf %70, %73 : vector<16x16xf32>
    %75 = math.exp %74 : vector<16x16xf32>
    %cst_33 = arith.constant dense<0.000000e+00> : vector<16xf32>
    %76 = vector.multi_reduction <add>, %75, %cst_33 [1] : vector<16x16xf32> to vector<16xf32>
    %77 = vector.shape_cast %76 : vector<16xf32> to vector<16x1xf32>
    %78 = tpu.reciprocal %77 {approx = true} : vector<16x1xf32> -> vector<16x1xf32>
    %79 = vector.broadcast %78 : vector<16x1xf32> to vector<16x16xf32>
    %80 = arith.mulf %75, %79 : vector<16x16xf32>
    %81 = arith.truncf %80 : vector<16x16xf32> to vector<16x16xbf16>
    %82 = vector.extract_strided_slice %25 {offsets = [0, 16], sizes = [16, 8], strides = [1, 1]} : vector<16x32xbf16> to vector<16x8xbf16>
    %cst_34 = arith.constant dense<0.000000e+00> : vector<16x8xf32>
    %83 = tpu.matmul %81, %82, %cst_34 {dimension_numbers = #tpu.dot_dimension_numbers<[1], [0], [0], [1], [0, 0, 1, 1], [], []>} : vector<16x16xbf16>, vector<16x8xbf16>, vector<16x8xf32> -> vector<16x8xf32>
    %84 = arith.truncf %83 : vector<16x8xf32> to vector<16x8xbf16>
    %85 = vector.extract_strided_slice %21 {offsets = [0, 16], sizes = [32, 8], strides = [1, 1]} : vector<32x32xbf16> to vector<32x8xbf16>
    %cst_35 = arith.constant dense<0.000000e+00> : vector<16x32xf32>
    %86 = tpu.matmul %84, %85, %cst_35 {dimension_numbers = #tpu.dot_dimension_numbers<[1], [1], [0], [0], [0, 0, 1, 0], [], []>} : vector<16x8xbf16>, vector<32x8xbf16>, vector<16x32xf32> -> vector<16x32xf32>
    %87 = arith.addf %66, %86 : vector<16x32xf32>
    %88 = vector.extract_strided_slice %23 {offsets = [0, 24], sizes = [16, 8], strides = [1, 1]} : vector<16x32xbf16> to vector<16x8xbf16>
    %89 = vector.extract_strided_slice %24 {offsets = [0, 24], sizes = [16, 8], strides = [1, 1]} : vector<16x32xbf16> to vector<16x8xbf16>
    %cst_36 = arith.constant dense<0.000000e+00> : vector<16x16xf32>
    %90 = tpu.matmul %88, %89, %cst_36 {dimension_numbers = #tpu.dot_dimension_numbers<[1], [1], [0], [0], [0, 0, 1, 0], [], []>} : vector<16x8xbf16>, vector<16x8xbf16>, vector<16x16xf32> -> vector<16x16xf32>
    %91 = arith.addf %90, %6 : vector<16x16xf32>
    %cst_37 = arith.constant dense<0xFF800000> : vector<16xf32>
    %92 = vector.multi_reduction <maximumf>, %91, %cst_37 [1] : vector<16x16xf32> to vector<16xf32>
    %93 = vector.shape_cast %92 : vector<16xf32> to vector<16x1xf32>
    %94 = vector.broadcast %93 : vector<16x1xf32> to vector<16x16xf32>
    %95 = arith.subf %91, %94 : vector<16x16xf32>
    %96 = math.exp %95 : vector<16x16xf32>
    %cst_38 = arith.constant dense<0.000000e+00> : vector<16xf32>
    %97 = vector.multi_reduction <add>, %96, %cst_38 [1] : vector<16x16xf32> to vector<16xf32>
    %98 = vector.shape_cast %97 : vector<16xf32> to vector<16x1xf32>
    %99 = tpu.reciprocal %98 {approx = true} : vector<16x1xf32> -> vector<16x1xf32>
    %100 = vector.broadcast %99 : vector<16x1xf32> to vector<16x16xf32>
    %101 = arith.mulf %96, %100 : vector<16x16xf32>
    %102 = arith.truncf %101 : vector<16x16xf32> to vector<16x16xbf16>
    %103 = vector.extract_strided_slice %25 {offsets = [0, 24], sizes = [16, 8], strides = [1, 1]} : vector<16x32xbf16> to vector<16x8xbf16>
    %cst_39 = arith.constant dense<0.000000e+00> : vector<16x8xf32>
    %104 = tpu.matmul %102, %103, %cst_39 {dimension_numbers = #tpu.dot_dimension_numbers<[1], [0], [0], [1], [0, 0, 1, 1], [], []>} : vector<16x16xbf16>, vector<16x8xbf16>, vector<16x8xf32> -> vector<16x8xf32>
    %105 = arith.truncf %104 : vector<16x8xf32> to vector<16x8xbf16>
    %106 = vector.extract_strided_slice %21 {offsets = [0, 24], sizes = [32, 8], strides = [1, 1]} : vector<32x32xbf16> to vector<32x8xbf16>
    %cst_40 = arith.constant dense<0.000000e+00> : vector<16x32xf32>
    %107 = tpu.matmul %105, %106, %cst_40 {dimension_numbers = #tpu.dot_dimension_numbers<[1], [1], [0], [0], [0, 0, 1, 0], [], []>} : vector<16x8xbf16>, vector<32x8xbf16>, vector<16x32xf32> -> vector<16x32xf32>
    %108 = arith.addf %87, %107 : vector<16x32xf32>
    %109 = arith.addf %108, %22 : vector<16x32xf32>
    %110 = arith.addf %0, %109 : vector<16x32xf32>
    %c48 = arith.constant 48 : index
    %c0_41 = arith.constant 0 : index
    %111 = vector.load %arg8[%c48, %c0_41] : memref<224x128xf32, #tpu.memory_space<vmem>>, vector<16x32xf32>
    %c64_42 = arith.constant 64 : index
    %c0_43 = arith.constant 0 : index
    %112 = vector.load %arg8[%c64_42, %c0_43] : memref<224x128xf32, #tpu.memory_space<vmem>>, vector<16x32xf32>
    %cst_44 = arith.constant dense<0.000000e+00> : vector<16xf32>
    %113 = vector.multi_reduction <add>, %110, %cst_44 [1] : vector<16x32xf32> to vector<16xf32>
    %114 = vector.shape_cast %113 : vector<16xf32> to vector<16x1xf32>
    %cst_45 = arith.constant 3.200000e+01 : f32
    %115 = vector.broadcast %cst_45 : f32 to vector<16x1xf32>
    %116 = arith.divf %114, %115 : vector<16x1xf32>
    %117 = arith.mulf %110, %110 : vector<16x32xf32>
    %cst_46 = arith.constant dense<0.000000e+00> : vector<16xf32>
    %118 = vector.multi_reduction <add>, %117, %cst_46 [1] : vector<16x32xf32> to vector<16xf32>
    %119 = vector.shape_cast %118 : vector<16xf32> to vector<16x1xf32>
    %cst_47 = arith.constant 3.200000e+01 : f32
    %120 = vector.broadcast %cst_47 : f32 to vector<16x1xf32>
    %121 = arith.divf %119, %120 : vector<16x1xf32>
    %122 = arith.mulf %116, %116 : vector<16x1xf32>
    %123 = arith.subf %121, %122 : vector<16x1xf32>
    %cst_48 = arith.constant 9.99999974E-6 : f32
    %124 = vector.broadcast %cst_48 : f32 to vector<16x1xf32>
    %125 = arith.addf %123, %124 : vector<16x1xf32>
    %126 = math.rsqrt %125 : vector<16x1xf32>
    %127 = vector.broadcast %116 : vector<16x1xf32> to vector<16x32xf32>
    %128 = arith.subf %110, %127 : vector<16x32xf32>
    %129 = vector.broadcast %126 : vector<16x1xf32> to vector<16x32xf32>
    %130 = arith.mulf %111, %129 : vector<16x32xf32>
    %131 = arith.mulf %128, %130 : vector<16x32xf32>
    %132 = arith.addf %131, %112 : vector<16x32xf32>
    %c96 = arith.constant 96 : index
    %c0_49 = arith.constant 0 : index
    %133 = vector.load %arg7[%c96, %c0_49] : memref<288x128xbf16, #tpu.memory_space<vmem>>, vector<32x32xbf16>
    %134 = arith.truncf %5 : vector<16x32xf32> to vector<16x32xbf16>
    %cst_50 = arith.constant dense<0.000000e+00> : vector<16x32xf32>
    %135 = tpu.matmul %134, %133, %cst_50 {dimension_numbers = #tpu.dot_dimension_numbers<[1], [0], [0], [1], [0, 0, 1, 1], [], []>} : vector<16x32xbf16>, vector<32x32xbf16>, vector<16x32xf32> -> vector<16x32xf32>
    %c80 = arith.constant 80 : index
    %c0_51 = arith.constant 0 : index
    %136 = vector.load %arg8[%c80, %c0_51] : memref<224x128xf32, #tpu.memory_space<vmem>>, vector<16x32xf32>
    %137 = arith.addf %135, %136 : vector<16x32xf32>
    %c128 = arith.constant 128 : index
    %c0_52 = arith.constant 0 : index
    %138 = vector.load %arg7[%c128, %c0_52] : memref<288x128xbf16, #tpu.memory_space<vmem>>, vector<32x32xbf16>
    %139 = arith.truncf %132 : vector<16x32xf32> to vector<16x32xbf16>
    %cst_53 = arith.constant dense<0.000000e+00> : vector<16x32xf32>
    %140 = tpu.matmul %139, %138, %cst_53 {dimension_numbers = #tpu.dot_dimension_numbers<[1], [0], [0], [1], [0, 0, 1, 1], [], []>} : vector<16x32xbf16>, vector<32x32xbf16>, vector<16x32xf32> -> vector<16x32xf32>
    %c96_54 = arith.constant 96 : index
    %c0_55 = arith.constant 0 : index
    %141 = vector.load %arg8[%c96_54, %c0_55] : memref<224x128xf32, #tpu.memory_space<vmem>>, vector<16x32xf32>
    %142 = arith.addf %140, %141 : vector<16x32xf32>
    %c160 = arith.constant 160 : index
    %c0_56 = arith.constant 0 : index
    %143 = vector.load %arg7[%c160, %c0_56] : memref<288x128xbf16, #tpu.memory_space<vmem>>, vector<32x32xbf16>
    %c112 = arith.constant 112 : index
    %c0_57 = arith.constant 0 : index
    %144 = vector.load %arg8[%c112, %c0_57] : memref<224x128xf32, #tpu.memory_space<vmem>>, vector<16x32xf32>
    %145 = arith.truncf %137 : vector<16x32xf32> to vector<16x32xbf16>
    %146 = arith.truncf %15 : vector<16x32xf32> to vector<16x32xbf16>
    %147 = arith.truncf %142 : vector<16x32xf32> to vector<16x32xbf16>
    %148 = vector.extract_strided_slice %145 {offsets = [0, 0], sizes = [16, 8], strides = [1, 1]} : vector<16x32xbf16> to vector<16x8xbf16>
    %149 = vector.extract_strided_slice %146 {offsets = [0, 0], sizes = [16, 8], strides = [1, 1]} : vector<16x32xbf16> to vector<16x8xbf16>
    %cst_58 = arith.constant dense<0.000000e+00> : vector<16x16xf32>
    %150 = tpu.matmul %148, %149, %cst_58 {dimension_numbers = #tpu.dot_dimension_numbers<[1], [1], [0], [0], [0, 0, 1, 0], [], []>} : vector<16x8xbf16>, vector<16x8xbf16>, vector<16x16xf32> -> vector<16x16xf32>
    %151 = arith.addf %150, %7 : vector<16x16xf32>
    %cst_59 = arith.constant dense<0xFF800000> : vector<16xf32>
    %152 = vector.multi_reduction <maximumf>, %151, %cst_59 [1] : vector<16x16xf32> to vector<16xf32>
    %153 = vector.shape_cast %152 : vector<16xf32> to vector<16x1xf32>
    %154 = vector.broadcast %153 : vector<16x1xf32> to vector<16x16xf32>
    %155 = arith.subf %151, %154 : vector<16x16xf32>
    %156 = math.exp %155 : vector<16x16xf32>
    %cst_60 = arith.constant dense<0.000000e+00> : vector<16xf32>
    %157 = vector.multi_reduction <add>, %156, %cst_60 [1] : vector<16x16xf32> to vector<16xf32>
    %158 = vector.shape_cast %157 : vector<16xf32> to vector<16x1xf32>
    %159 = tpu.reciprocal %158 {approx = true} : vector<16x1xf32> -> vector<16x1xf32>
    %160 = vector.broadcast %159 : vector<16x1xf32> to vector<16x16xf32>
    %161 = arith.mulf %156, %160 : vector<16x16xf32>
    %162 = arith.truncf %161 : vector<16x16xf32> to vector<16x16xbf16>
    %163 = vector.extract_strided_slice %147 {offsets = [0, 0], sizes = [16, 8], strides = [1, 1]} : vector<16x32xbf16> to vector<16x8xbf16>
    %cst_61 = arith.constant dense<0.000000e+00> : vector<16x8xf32>
    %164 = tpu.matmul %162, %163, %cst_61 {dimension_numbers = #tpu.dot_dimension_numbers<[1], [0], [0], [1], [0, 0, 1, 1], [], []>} : vector<16x16xbf16>, vector<16x8xbf16>, vector<16x8xf32> -> vector<16x8xf32>
    %165 = arith.truncf %164 : vector<16x8xf32> to vector<16x8xbf16>
    %166 = vector.extract_strided_slice %143 {offsets = [0, 0], sizes = [32, 8], strides = [1, 1]} : vector<32x32xbf16> to vector<32x8xbf16>
    %cst_62 = arith.constant dense<0.000000e+00> : vector<16x32xf32>
    %167 = tpu.matmul %165, %166, %cst_62 {dimension_numbers = #tpu.dot_dimension_numbers<[1], [1], [0], [0], [0, 0, 1, 0], [], []>} : vector<16x8xbf16>, vector<32x8xbf16>, vector<16x32xf32> -> vector<16x32xf32>
    %168 = vector.extract_strided_slice %145 {offsets = [0, 8], sizes = [16, 8], strides = [1, 1]} : vector<16x32xbf16> to vector<16x8xbf16>
    %169 = vector.extract_strided_slice %146 {offsets = [0, 8], sizes = [16, 8], strides = [1, 1]} : vector<16x32xbf16> to vector<16x8xbf16>
    %cst_63 = arith.constant dense<0.000000e+00> : vector<16x16xf32>
    %170 = tpu.matmul %168, %169, %cst_63 {dimension_numbers = #tpu.dot_dimension_numbers<[1], [1], [0], [0], [0, 0, 1, 0], [], []>} : vector<16x8xbf16>, vector<16x8xbf16>, vector<16x16xf32> -> vector<16x16xf32>
    %171 = arith.addf %170, %7 : vector<16x16xf32>
    %cst_64 = arith.constant dense<0xFF800000> : vector<16xf32>
    %172 = vector.multi_reduction <maximumf>, %171, %cst_64 [1] : vector<16x16xf32> to vector<16xf32>
    %173 = vector.shape_cast %172 : vector<16xf32> to vector<16x1xf32>
    %174 = vector.broadcast %173 : vector<16x1xf32> to vector<16x16xf32>
    %175 = arith.subf %171, %174 : vector<16x16xf32>
    %176 = math.exp %175 : vector<16x16xf32>
    %cst_65 = arith.constant dense<0.000000e+00> : vector<16xf32>
    %177 = vector.multi_reduction <add>, %176, %cst_65 [1] : vector<16x16xf32> to vector<16xf32>
    %178 = vector.shape_cast %177 : vector<16xf32> to vector<16x1xf32>
    %179 = tpu.reciprocal %178 {approx = true} : vector<16x1xf32> -> vector<16x1xf32>
    %180 = vector.broadcast %179 : vector<16x1xf32> to vector<16x16xf32>
    %181 = arith.mulf %176, %180 : vector<16x16xf32>
    %182 = arith.truncf %181 : vector<16x16xf32> to vector<16x16xbf16>
    %183 = vector.extract_strided_slice %147 {offsets = [0, 8], sizes = [16, 8], strides = [1, 1]} : vector<16x32xbf16> to vector<16x8xbf16>
    %cst_66 = arith.constant dense<0.000000e+00> : vector<16x8xf32>
    %184 = tpu.matmul %182, %183, %cst_66 {dimension_numbers = #tpu.dot_dimension_numbers<[1], [0], [0], [1], [0, 0, 1, 1], [], []>} : vector<16x16xbf16>, vector<16x8xbf16>, vector<16x8xf32> -> vector<16x8xf32>
    %185 = arith.truncf %184 : vector<16x8xf32> to vector<16x8xbf16>
    %186 = vector.extract_strided_slice %143 {offsets = [0, 8], sizes = [32, 8], strides = [1, 1]} : vector<32x32xbf16> to vector<32x8xbf16>
    %cst_67 = arith.constant dense<0.000000e+00> : vector<16x32xf32>
    %187 = tpu.matmul %185, %186, %cst_67 {dimension_numbers = #tpu.dot_dimension_numbers<[1], [1], [0], [0], [0, 0, 1, 0], [], []>} : vector<16x8xbf16>, vector<32x8xbf16>, vector<16x32xf32> -> vector<16x32xf32>
    %188 = arith.addf %167, %187 : vector<16x32xf32>
    %189 = vector.extract_strided_slice %145 {offsets = [0, 16], sizes = [16, 8], strides = [1, 1]} : vector<16x32xbf16> to vector<16x8xbf16>
    %190 = vector.extract_strided_slice %146 {offsets = [0, 16], sizes = [16, 8], strides = [1, 1]} : vector<16x32xbf16> to vector<16x8xbf16>
    %cst_68 = arith.constant dense<0.000000e+00> : vector<16x16xf32>
    %191 = tpu.matmul %189, %190, %cst_68 {dimension_numbers = #tpu.dot_dimension_numbers<[1], [1], [0], [0], [0, 0, 1, 0], [], []>} : vector<16x8xbf16>, vector<16x8xbf16>, vector<16x16xf32> -> vector<16x16xf32>
    %192 = arith.addf %191, %7 : vector<16x16xf32>
    %cst_69 = arith.constant dense<0xFF800000> : vector<16xf32>
    %193 = vector.multi_reduction <maximumf>, %192, %cst_69 [1] : vector<16x16xf32> to vector<16xf32>
    %194 = vector.shape_cast %193 : vector<16xf32> to vector<16x1xf32>
    %195 = vector.broadcast %194 : vector<16x1xf32> to vector<16x16xf32>
    %196 = arith.subf %192, %195 : vector<16x16xf32>
    %197 = math.exp %196 : vector<16x16xf32>
    %cst_70 = arith.constant dense<0.000000e+00> : vector<16xf32>
    %198 = vector.multi_reduction <add>, %197, %cst_70 [1] : vector<16x16xf32> to vector<16xf32>
    %199 = vector.shape_cast %198 : vector<16xf32> to vector<16x1xf32>
    %200 = tpu.reciprocal %199 {approx = true} : vector<16x1xf32> -> vector<16x1xf32>
    %201 = vector.broadcast %200 : vector<16x1xf32> to vector<16x16xf32>
    %202 = arith.mulf %197, %201 : vector<16x16xf32>
    %203 = arith.truncf %202 : vector<16x16xf32> to vector<16x16xbf16>
    %204 = vector.extract_strided_slice %147 {offsets = [0, 16], sizes = [16, 8], strides = [1, 1]} : vector<16x32xbf16> to vector<16x8xbf16>
    %cst_71 = arith.constant dense<0.000000e+00> : vector<16x8xf32>
    %205 = tpu.matmul %203, %204, %cst_71 {dimension_numbers = #tpu.dot_dimension_numbers<[1], [0], [0], [1], [0, 0, 1, 1], [], []>} : vector<16x16xbf16>, vector<16x8xbf16>, vector<16x8xf32> -> vector<16x8xf32>
    %206 = arith.truncf %205 : vector<16x8xf32> to vector<16x8xbf16>
    %207 = vector.extract_strided_slice %143 {offsets = [0, 16], sizes = [32, 8], strides = [1, 1]} : vector<32x32xbf16> to vector<32x8xbf16>
    %cst_72 = arith.constant dense<0.000000e+00> : vector<16x32xf32>
    %208 = tpu.matmul %206, %207, %cst_72 {dimension_numbers = #tpu.dot_dimension_numbers<[1], [1], [0], [0], [0, 0, 1, 0], [], []>} : vector<16x8xbf16>, vector<32x8xbf16>, vector<16x32xf32> -> vector<16x32xf32>
    %209 = arith.addf %188, %208 : vector<16x32xf32>
    %210 = vector.extract_strided_slice %145 {offsets = [0, 24], sizes = [16, 8], strides = [1, 1]} : vector<16x32xbf16> to vector<16x8xbf16>
    %211 = vector.extract_strided_slice %146 {offsets = [0, 24], sizes = [16, 8], strides = [1, 1]} : vector<16x32xbf16> to vector<16x8xbf16>
    %cst_73 = arith.constant dense<0.000000e+00> : vector<16x16xf32>
    %212 = tpu.matmul %210, %211, %cst_73 {dimension_numbers = #tpu.dot_dimension_numbers<[1], [1], [0], [0], [0, 0, 1, 0], [], []>} : vector<16x8xbf16>, vector<16x8xbf16>, vector<16x16xf32> -> vector<16x16xf32>
    %213 = arith.addf %212, %7 : vector<16x16xf32>
    %cst_74 = arith.constant dense<0xFF800000> : vector<16xf32>
    %214 = vector.multi_reduction <maximumf>, %213, %cst_74 [1] : vector<16x16xf32> to vector<16xf32>
    %215 = vector.shape_cast %214 : vector<16xf32> to vector<16x1xf32>
    %216 = vector.broadcast %215 : vector<16x1xf32> to vector<16x16xf32>
    %217 = arith.subf %213, %216 : vector<16x16xf32>
    %218 = math.exp %217 : vector<16x16xf32>
    %cst_75 = arith.constant dense<0.000000e+00> : vector<16xf32>
    %219 = vector.multi_reduction <add>, %218, %cst_75 [1] : vector<16x16xf32> to vector<16xf32>
    %220 = vector.shape_cast %219 : vector<16xf32> to vector<16x1xf32>
    %221 = tpu.reciprocal %220 {approx = true} : vector<16x1xf32> -> vector<16x1xf32>
    %222 = vector.broadcast %221 : vector<16x1xf32> to vector<16x16xf32>
    %223 = arith.mulf %218, %222 : vector<16x16xf32>
    %224 = arith.truncf %223 : vector<16x16xf32> to vector<16x16xbf16>
    %225 = vector.extract_strided_slice %147 {offsets = [0, 24], sizes = [16, 8], strides = [1, 1]} : vector<16x32xbf16> to vector<16x8xbf16>
    %cst_76 = arith.constant dense<0.000000e+00> : vector<16x8xf32>
    %226 = tpu.matmul %224, %225, %cst_76 {dimension_numbers = #tpu.dot_dimension_numbers<[1], [0], [0], [1], [0, 0, 1, 1], [], []>} : vector<16x16xbf16>, vector<16x8xbf16>, vector<16x8xf32> -> vector<16x8xf32>
    %227 = arith.truncf %226 : vector<16x8xf32> to vector<16x8xbf16>
    %228 = vector.extract_strided_slice %143 {offsets = [0, 24], sizes = [32, 8], strides = [1, 1]} : vector<32x32xbf16> to vector<32x8xbf16>
    %cst_77 = arith.constant dense<0.000000e+00> : vector<16x32xf32>
    %229 = tpu.matmul %227, %228, %cst_77 {dimension_numbers = #tpu.dot_dimension_numbers<[1], [1], [0], [0], [0, 0, 1, 0], [], []>} : vector<16x8xbf16>, vector<32x8xbf16>, vector<16x32xf32> -> vector<16x32xf32>
    %230 = arith.addf %209, %229 : vector<16x32xf32>
    %231 = arith.addf %230, %144 : vector<16x32xf32>
    %232 = arith.addf %5, %231 : vector<16x32xf32>
    %c128_78 = arith.constant 128 : index
    %c0_79 = arith.constant 0 : index
    %233 = vector.load %arg8[%c128_78, %c0_79] : memref<224x128xf32, #tpu.memory_space<vmem>>, vector<16x32xf32>
    %c144 = arith.constant 144 : index
    %c0_80 = arith.constant 0 : index
    %234 = vector.load %arg8[%c144, %c0_80] : memref<224x128xf32, #tpu.memory_space<vmem>>, vector<16x32xf32>
    %cst_81 = arith.constant dense<0.000000e+00> : vector<16xf32>
    %235 = vector.multi_reduction <add>, %232, %cst_81 [1] : vector<16x32xf32> to vector<16xf32>
    %236 = vector.shape_cast %235 : vector<16xf32> to vector<16x1xf32>
    %cst_82 = arith.constant 3.200000e+01 : f32
    %237 = vector.broadcast %cst_82 : f32 to vector<16x1xf32>
    %238 = arith.divf %236, %237 : vector<16x1xf32>
    %239 = arith.mulf %232, %232 : vector<16x32xf32>
    %cst_83 = arith.constant dense<0.000000e+00> : vector<16xf32>
    %240 = vector.multi_reduction <add>, %239, %cst_83 [1] : vector<16x32xf32> to vector<16xf32>
    %241 = vector.shape_cast %240 : vector<16xf32> to vector<16x1xf32>
    %cst_84 = arith.constant 3.200000e+01 : f32
    %242 = vector.broadcast %cst_84 : f32 to vector<16x1xf32>
    %243 = arith.divf %241, %242 : vector<16x1xf32>
    %244 = arith.mulf %238, %238 : vector<16x1xf32>
    %245 = arith.subf %243, %244 : vector<16x1xf32>
    %cst_85 = arith.constant 9.99999974E-6 : f32
    %246 = vector.broadcast %cst_85 : f32 to vector<16x1xf32>
    %247 = arith.addf %245, %246 : vector<16x1xf32>
    %248 = math.rsqrt %247 : vector<16x1xf32>
    %249 = vector.broadcast %238 : vector<16x1xf32> to vector<16x32xf32>
    %250 = arith.subf %232, %249 : vector<16x32xf32>
    %251 = vector.broadcast %248 : vector<16x1xf32> to vector<16x32xf32>
    %252 = arith.mulf %233, %251 : vector<16x32xf32>
    %253 = arith.mulf %250, %252 : vector<16x32xf32>
    %254 = arith.addf %253, %234 : vector<16x32xf32>
    %c192 = arith.constant 192 : index
    %c0_86 = arith.constant 0 : index
    %255 = vector.load %arg7[%c192, %c0_86] : memref<288x128xbf16, #tpu.memory_space<vmem>>, vector<32x64xbf16>
    %256 = arith.truncf %254 : vector<16x32xf32> to vector<16x32xbf16>
    %cst_87 = arith.constant dense<0.000000e+00> : vector<16x64xf32>
    %257 = tpu.matmul %256, %255, %cst_87 {dimension_numbers = #tpu.dot_dimension_numbers<[1], [0], [0], [1], [0, 0, 1, 1], [], []>} : vector<16x32xbf16>, vector<32x64xbf16>, vector<16x64xf32> -> vector<16x64xf32>
    %c160_88 = arith.constant 160 : index
    %c0_89 = arith.constant 0 : index
    %258 = vector.load %arg8[%c160_88, %c0_89] : memref<224x128xf32, #tpu.memory_space<vmem>>, vector<16x64xf32>
    %259 = arith.addf %257, %258 : vector<16x64xf32>
    %cst_90 = arith.constant 0.000000e+00 : f32
    %260 = vector.broadcast %cst_90 : f32 to vector<16x64xf32>
    %261 = arith.maximumf %259, %260 : vector<16x64xf32>
    %c224 = arith.constant 224 : index
    %c0_91 = arith.constant 0 : index
    %262 = vector.load %arg7[%c224, %c0_91] : memref<288x128xbf16, #tpu.memory_space<vmem>>, vector<64x32xbf16>
    %263 = arith.truncf %261 : vector<16x64xf32> to vector<16x64xbf16>
    %cst_92 = arith.constant dense<0.000000e+00> : vector<16x32xf32>
    %264 = tpu.matmul %263, %262, %cst_92 {dimension_numbers = #tpu.dot_dimension_numbers<[1], [0], [0], [1], [0, 0, 1, 1], [], []>} : vector<16x64xbf16>, vector<64x32xbf16>, vector<16x32xf32> -> vector<16x32xf32>
    %c176 = arith.constant 176 : index
    %c0_93 = arith.constant 0 : index
    %265 = vector.load %arg8[%c176, %c0_93] : memref<224x128xf32, #tpu.memory_space<vmem>>, vector<16x32xf32>
    %266 = arith.addf %264, %265 : vector<16x32xf32>
    %267 = arith.addf %254, %266 : vector<16x32xf32>
    %c192_94 = arith.constant 192 : index
    %c0_95 = arith.constant 0 : index
    %268 = vector.load %arg8[%c192_94, %c0_95] : memref<224x128xf32, #tpu.memory_space<vmem>>, vector<16x32xf32>
    %c208 = arith.constant 208 : index
    %c0_96 = arith.constant 0 : index
    %269 = vector.load %arg8[%c208, %c0_96] : memref<224x128xf32, #tpu.memory_space<vmem>>, vector<16x32xf32>
    %cst_97 = arith.constant dense<0.000000e+00> : vector<16xf32>
    %270 = vector.multi_reduction <add>, %267, %cst_97 [1] : vector<16x32xf32> to vector<16xf32>
    %271 = vector.shape_cast %270 : vector<16xf32> to vector<16x1xf32>
    %cst_98 = arith.constant 3.200000e+01 : f32
    %272 = vector.broadcast %cst_98 : f32 to vector<16x1xf32>
    %273 = arith.divf %271, %272 : vector<16x1xf32>
    %274 = arith.mulf %267, %267 : vector<16x32xf32>
    %cst_99 = arith.constant dense<0.000000e+00> : vector<16xf32>
    %275 = vector.multi_reduction <add>, %274, %cst_99 [1] : vector<16x32xf32> to vector<16xf32>
    %276 = vector.shape_cast %275 : vector<16xf32> to vector<16x1xf32>
    %cst_100 = arith.constant 3.200000e+01 : f32
    %277 = vector.broadcast %cst_100 : f32 to vector<16x1xf32>
    %278 = arith.divf %276, %277 : vector<16x1xf32>
    %279 = arith.mulf %273, %273 : vector<16x1xf32>
    %280 = arith.subf %278, %279 : vector<16x1xf32>
    %cst_101 = arith.constant 9.99999974E-6 : f32
    %281 = vector.broadcast %cst_101 : f32 to vector<16x1xf32>
    %282 = arith.addf %280, %281 : vector<16x1xf32>
    %283 = math.rsqrt %282 : vector<16x1xf32>
    %284 = vector.broadcast %273 : vector<16x1xf32> to vector<16x32xf32>
    %285 = arith.subf %267, %284 : vector<16x32xf32>
    %286 = vector.broadcast %283 : vector<16x1xf32> to vector<16x32xf32>
    %287 = arith.mulf %268, %286 : vector<16x32xf32>
    %288 = arith.mulf %285, %287 : vector<16x32xf32>
    %289 = arith.addf %288, %269 : vector<16x32xf32>
    %c0_102 = arith.constant 0 : index
    %c0_103 = arith.constant 0 : index
    %290 = vector.load %arg9[%c0_102, %c0_103] : memref<16x32xf32, #tpu.memory_space<vmem>>, vector<16x32xf32>
    tpu.vector_store %arg9[%c0_102, %c0_103], %289 {strides = array<i32>} : memref<16x32xf32, #tpu.memory_space<vmem>>, vector<16x32xf32>,
    return
  }
  func.func @transform_0(%arg0: i32) -> (i32, i32) {
    %c0_i32 = arith.constant 0 : i32
    %c0_i32_0 = arith.constant 0 : i32
    return %arg0, %c0_i32 : i32, i32
  }
  func.func @transform_1(%arg0: i32) -> (i32, i32) {
    %c0_i32 = arith.constant 0 : i32
    %c0_i32_0 = arith.constant 0 : i32
    return %arg0, %c0_i32 : i32, i32
  }
  func.func @transform_2(%arg0: i32) -> (i32, i32) {
    %c0_i32 = arith.constant 0 : i32
    %c0_i32_0 = arith.constant 0 : i32
    return %arg0, %c0_i32 : i32, i32
  }
  func.func @transform_3(%arg0: i32) -> (i32, i32) {
    %c0_i32 = arith.constant 0 : i32
    %c0_i32_0 = arith.constant 0 : i32
    return %arg0, %c0_i32 : i32, i32
  }
  func.func @transform_4(%arg0: i32) -> (i32, i32) {
    %c0_i32 = arith.constant 0 : i32
    %c0_i32_0 = arith.constant 0 : i32
    %c0_i32_1 = arith.constant 0 : i32
    return %c0_i32, %c0_i32_0 : i32, i32
  }
  func.func @transform_5(%arg0: i32) -> (i32, i32) {
    %c0_i32 = arith.constant 0 : i32
    %c0_i32_0 = arith.constant 0 : i32
    %c0_i32_1 = arith.constant 0 : i32
    return %c0_i32, %c0_i32_0 : i32, i32
  }
  func.func @transform_6(%arg0: i32) -> (i32, i32) {
    %c0_i32 = arith.constant 0 : i32
    %c0_i32_0 = arith.constant 0 : i32
    %c0_i32_1 = arith.constant 0 : i32
    return %c0_i32, %c0_i32_0 : i32, i32
  }
  func.func @transform_7(%arg0: i32) -> (i32, i32) {
    %c0_i32 = arith.constant 0 : i32
    %c0_i32_0 = arith.constant 0 : i32
    %c0_i32_1 = arith.constant 0 : i32
    return %c0_i32, %c0_i32_0 : i32, i32
  }
  func.func @transform_8(%arg0: i32) -> (i32, i32) {
    %c0_i32 = arith.constant 0 : i32
    %c0_i32_0 = arith.constant 0 : i32
    return %arg0, %c0_i32 : i32, i32
  }
}

</mosaic_0001>

<llo_original>
// kernel: transformer_decoder_layer_stacked.1
$region0: #{transformer_decoder_layer_stacked.1}
  #allocation0 [shape = 'u32[]', space=smem, size = 0x4, offset = 0x4, fixed_abs, tag = 'smem constant byte address 0x4 - core index']
  #allocation1 [shape = 'u32[144,128]{1,0:T(1,128)}', space=vmem, size = 0x12000, scoped, tag = 'internal scratch']
  %s0 = inlined_call_operand.vmem [shape: f32[16,32], index: 0, kind: input, shape index: {}]
  %s1 = inlined_call_operand.vmem [shape: f32[16,32], index: 1, kind: input, shape index: {}]
  %s2 = inlined_call_operand.vmem [shape: f32[16,32], index: 2, kind: input, shape index: {}]
  %s3 = inlined_call_operand.vmem [shape: f32[16,32], index: 3, kind: input, shape index: {}]
  %s4 = inlined_call_operand.vmem [shape: f32[16,16], index: 4, kind: input, shape index: {}, may-alias: {4,5}]
  %s5 = inlined_call_operand.vmem [shape: f32[16,16], index: 5, kind: input, shape index: {}, may-alias: {4,5}]
  %s6 = inlined_call_operand.vmem [shape: bf16[288,128], index: 6, kind: input, shape index: {}]
  %s7 = inlined_call_operand.vmem [shape: f32[224,128], index: 7, kind: input, shape index: {}]
  %s8 = inlined_call_operand.hbm [shape: f32[16,32], index: 8, kind: output, shape index: {}]
  %s9 = sld [smem:[#allocation0]]
  $region42: #{transformer_decoder_layer_stacked.1} parent=0
    _
  %s11 = ssub.s32 1, %s9
  %s12 = scalar_select 0, %s11, %s9
  $region1: #{transformer_decoder_layer_stacked.1} parent=0
    #allocation2 [shape = 'u8[8192]{0}', space=vmem, size = 0x2000, scoped, tag = 'output window, operand 0, single buffered']
    #allocation3 [shape = 's32[1]{0}', space=sflag, size = 0x4, scoped, tag = 'scoped memory for transformer_decoder_layer_stacked.1']
    %13 = vsyncpa [#allocation3], 0
    // Predicated region
    $region2: #{transformer_decoder_layer_stacked.1} parent=1 // pred_check
      _
    $region3: #{transformer_decoder_layer_stacked.1} parent=1 // pred_check_branch
      %15 = sbr.rel (0) target = $region5
    $region4: #{transformer_decoder_layer_stacked.1} parent=1 // pred_region
      _
    $region5: #{transformer_decoder_layer_stacked.1} parent=1 // pred_fallthru
      _
    // Predicated region
    $region6: #{transformer_decoder_layer_stacked.1} parent=1 // pred_check
      _
    $region7: #{transformer_decoder_layer_stacked.1} parent=1 // pred_check_branch
      %17 = sbr.rel (0) target = $region9
    $region8: #{transformer_decoder_layer_stacked.1} parent=1 // pred_region
      _
    $region9: #{transformer_decoder_layer_stacked.1} parent=1 // pred_fallthru
      _
    // Predicated region
    $region10: #{transformer_decoder_layer_stacked.1} parent=1 // pred_check
      _
    $region11: #{transformer_decoder_layer_stacked.1} parent=1 // pred_check_branch
      %19 = sbr.rel (0) target = $region13
    $region12: #{transformer_decoder_layer_stacked.1} parent=1 // pred_region
      _
    $region13: #{transformer_decoder_layer_stacked.1} parent=1 // pred_fallthru
      _
    // Predicated region
    $region14: #{transformer_decoder_layer_stacked.1} parent=1 // pred_check
      _
    $region15: #{transformer_decoder_layer_stacked.1} parent=1 // pred_check_branch
      %21 = sbr.rel (0) target = $region17
    $region16: #{transformer_decoder_layer_stacked.1} parent=1 // pred_region
      _
    $region17: #{transformer_decoder_layer_stacked.1} parent=1 // pred_fallthru
      _
    // Predicated region
    $region18: #{transformer_decoder_layer_stacked.1} parent=1 // pred_check
      _
    $region19: #{transformer_decoder_layer_stacked.1} parent=1 // pred_check_branch
      %23 = sbr.rel (0) target = $region21
    $region20: #{transformer_decoder_layer_stacked.1} parent=1 // pred_region
      _
    $region21: #{transformer_decoder_layer_stacked.1} parent=1 // pred_fallthru
      _
    // Predicated region
    $region22: #{transformer_decoder_layer_stacked.1} parent=1 // pred_check
      _
    $region23: #{transformer_decoder_layer_stacked.1} parent=1 // pred_check_branch
      %25 = sbr.rel (0) target = $region25
    $region24: #{transformer_decoder_layer_stacked.1} parent=1 // pred_region
      _
    $region25: #{transformer_decoder_layer_stacked.1} parent=1 // pred_fallthru
      _
    // Predicated region
    $region26: #{transformer_decoder_layer_stacked.1} parent=1 // pred_check
      _
    $region27: #{transformer_decoder_layer_stacked.1} parent=1 // pred_check_branch
      %27 = sbr.rel (0) target = $region29
    $region28: #{transformer_decoder_layer_stacked.1} parent=1 // pred_region
      _
    $region29: #{transformer_decoder_layer_stacked.1} parent=1 // pred_fallthru
      _
    // Predicated region
    $region30: #{transformer_decoder_layer_stacked.1} parent=1 // pred_check
      _
    $region31: #{transformer_decoder_layer_stacked.1} parent=1 // pred_check_branch
      %29 = sbr.rel (0) target = $region33
    $region32: #{transformer_decoder_layer_stacked.1} parent=1 // pred_region
      _
    $region33: #{transformer_decoder_layer_stacked.1} parent=1 // pred_fallthru
      _
    %v31 = vld [vmem:[%s0] sm:$0xff]
    %v32 = vld [vmem:[%s0 + $0x8] sm:$0xff]
    %v33 = vld [vmem:[%s1] sm:$0xff]
    %v34 = vld [vmem:[%s1 + $0x8] sm:$0xff]
    %v35 = vadd.f32 %v31, %v33
    %v36 = vadd.f32 %v32, %v34
    %v37 = vld [vmem:[%s2] sm:$0xff]
    %v38 = vld [vmem:[%s2 + $0x8] sm:$0xff]
    %v39 = vld [vmem:[%s3] sm:$0xff]
    %v40 = vld [vmem:[%s3 + $0x8] sm:$0xff]
    %v41 = vadd.f32 %v37, %v39
    %v42 = vadd.f32 %v38, %v40
    %v43 = vld [vmem:[%s4] sm:$0xff]
    %v44 = vld [vmem:[%s4 + $0x8] sm:$0xff]
    %v45 = vld [vmem:[%s5] sm:$0xff]
    %v46 = vld [vmem:[%s5 + $0x8] sm:$0xff]
    %v47 = vld [vmem:[%s6] sm:$0xf]
    %v48 = vld [vmem:[%s6 + $0x4] sm:$0xf]
    %v49 = vld [vmem:[%s6 + $0x8] sm:$0xf]
    %v50 = vld [vmem:[%s6 + $0xc] sm:$0xf]
    %v51 = vpack.c.bf16 %v36, %v35
    %v52 = vld [vmem:[%s7] sm:$0xff]
    %v53 = vld [vmem:[%s7 + $0x8] sm:$0xff]
    %v58 = vunpack.c.l.b16 %v47
    %v59 = vunpack.c.l.b16 %v48
    %v60 = vunpack.c.l.b16 %v49
    %v61 = vunpack.c.l.b16 %v50
    %v62 = vpack.c.b16 %v59, %v58
    %v63 = vpack.c.b16 %v61, %v60
    %vm66 = vcmask 261120
    %v68 = vsel %vm66, %v51, 0
    %70 = vmatprep.subr.bf16.mxu0 0
    %71 = vmatpush1.bf16.msra.mxu0 %v62
    %72 = vmatprep.subr.bf16.mxu0 0
    %73 = vmatpush1.bf16.msra.mxu0 %v63
    %74 = vmatprep.subr.bf16.mxu0 0
    %75 = vmatpush1.bf16.msra.mxu0 0
    %76 = vmatprep.subr.bf16.mxu0 0
    %77 = vmatpush1.bf16.msra.mxu0 0
    %78 = vmatprep.subr.bf16.mxu0 0
    %79 = vmatpush1.bf16.msra.mxu0 0
    %80 = vmatprep.subr.bf16.mxu0 0
    %81 = vmatpush1.bf16.msra.mxu0 0
    %82 = vmatprep.subr.bf16.mxu0 0
    %83 = vmatpush1.bf16.msra.mxu0 0
    %84 = vmatprep.subr.bf16.mxu0 0
    %85 = vmatpush1.bf16.msra.mxu0 0
    %86 = vmatprep.subr.bf16.mxu0 0
    %87 = vmatpush1.bf16.msra.mxu0 0
    %88 = vmatprep.subr.bf16.mxu0 0
    %89 = vmatpush1.bf16.msra.mxu0 0
    %90 = vmatprep.subr.bf16.mxu0 0
    %91 = vmatpush1.bf16.msra.mxu0 0
    %92 = vmatprep.subr.bf16.mxu0 0
    %93 = vmatpush1.bf16.msra.mxu0 0
    %94 = vmatprep.subr.bf16.mxu0 0
    %95 = vmatpush1.bf16.msra.mxu0 0
    %96 = vmatprep.subr.bf16.mxu0 0
    %97 = vmatpush1.bf16.msra.mxu0 0
    %98 = vmatprep.subr.bf16.mxu0 0
    %99 = vmatpush1.bf16.msra.mxu0 0
    %100 = vmatprep.subr.bf16.mxu0 0
    %101 = vmatpush1.bf16.msra.mxu0 0
    %102 = vmatprep.mubr.bf16.mxu0 0
    %103 = vmatmul.mubr.bf16.gmra.mrb[0].mxu0 %v68
    %v104 = vpop.f32.mrb[0].mxu0
    %v105 = vadd.f32 %v52, %v104
    %v106 = vpop.f32.mrb[0].mxu0
    %v107 = vpop.f32.mrb[0].mxu0
    %v108 = vadd.f32 %v53, %v107
    %v109 = vpop.f32.mrb[0].mxu0
    %110 = vdwg.mxu0
    %v111 = vld [vmem:[%s6 + $0x10] sm:$0xf]
    %v112 = vld [vmem:[%s6 + $0x14] sm:$0xf]
    %v113 = vld [vmem:[%s6 + $0x18] sm:$0xf]
    %v114 = vld [vmem:[%s6 + $0x1c] sm:$0xf]
    %v115 = vpack.c.bf16 %v32, %v31
    %v116 = vld [vmem:[%s7 + $0x10] sm:$0xff]
    %v117 = vld [vmem:[%s7 + $0x18] sm:$0xff]
    %v122 = vunpack.c.l.b16 %v111
    %v123 = vunpack.c.l.b16 %v112
    %v124 = vunpack.c.l.b16 %v113
    %v125 = vunpack.c.l.b16 %v114
    %v126 = vpack.c.b16 %v123, %v122
    %v127 = vpack.c.b16 %v125, %v124
    %v131 = vsel %vm66, %v115, 0
    %133 = vmatprep.subr.bf16.mxu0 0
    %134 = vmatpush1.bf16.msra.mxu0 %v126
    %135 = vmatprep.subr.bf16.mxu0 0
    %136 = vmatpush1.bf16.msra.mxu0 %v127
    %137 = vmatprep.subr.bf16.mxu0 0
    %138 = vmatpush1.bf16.msra.mxu0 0
    %139 = vmatprep.subr.bf16.mxu0 0
    %140 = vmatpush1.bf16.msra.mxu0 0
    %141 = vmatprep.subr.bf16.mxu0 0
    %142 = vmatpush1.bf16.msra.mxu0 0
    %143 = vmatprep.subr.bf16.mxu0 0
    %144 = vmatpush1.bf16.msra.mxu0 0
    %145 = vmatprep.subr.bf16.mxu0 0
    %146 = vmatpush1.bf16.msra.mxu0 0
    %147 = vmatprep.subr.bf16.mxu0 0
    %148 = vmatpush1.bf16.msra.mxu0 0
    %149 = vmatprep.subr.bf16.mxu0 0
    %150 = vmatpush1.bf16.msra.mxu0 0
    %151 = vmatprep.subr.bf16.mxu0 0
    %152 = vmatpush1.bf16.msra.mxu0 0
    %153 = vmatprep.subr.bf16.mxu0 0
    %154 = vmatpush1.bf16.msra.mxu0 0
    %155 = vmatprep.subr.bf16.mxu0 0
    %156 = vmatpush1.bf16.msra.mxu0 0
    %157 = vmatprep.subr.bf16.mxu0 0
    %158 = vmatpush1.bf16.msra.mxu0 0
    %159 = vmatprep.subr.bf16.mxu0 0
    %160 = vmatpush1.bf16.msra.mxu0 0
    %161 = vmatprep.subr.bf16.mxu0 0
    %162 = vmatpush1.bf16.msra.mxu0 0
    %163 = vmatprep.subr.bf16.mxu0 0
    %164 = vmatpush1.bf16.msra.mxu0 0
    %165 = vmatprep.mubr.bf16.mxu0 0
    %166 = vmatmul.mubr.bf16.gmra.mrb[0].mxu0 %v131
    %v167 = vpop.f32.mrb[0].mxu0
    %v168 = vadd.f32 %v116, %v167
    %v169 = vpop.f32.mrb[0].mxu0
    %v170 = vpop.f32.mrb[0].mxu0
    %v171 = vadd.f32 %v117, %v170
    %v172 = vpop.f32.mrb[0].mxu0
    %173 = vdwg.mxu0
    %v174 = vld [vmem:[%s6 + $0x20] sm:$0xf]
    %v175 = vld [vmem:[%s6 + $0x24] sm:$0xf]
    %v176 = vld [vmem:[%s6 + $0x28] sm:$0xf]
    %v177 = vld [vmem:[%s6 + $0x2c] sm:$0xf]
    %v178 = vld [vmem:[%s7 + $0x20] sm:$0xff]
    %v179 = vld [vmem:[%s7 + $0x28] sm:$0xff]
    %v180 = vpack.c.bf16 %v108, %v105
    %v181 = vpack.c.bf16 %v171, %v168
    %183 = vrot.lane.b32.xlu0 %v180, 96
    %v184 = vpop.permute.xlu0 %183
    %vm185 = vcmask 64512
    %v187 = vsel %vm185, %v180, 0
    %v190 = vsel %vm185, %v184, 0
    %192 = vmatprep.subr.bf16.mxu0 0
    %193 = vmatpush1.bf16.xpose.msra.mxu0 %v190
    %194 = vmatprep.subr.bf16.mxu0 0
    %195 = vmatpush1.bf16.xpose.msra.mxu0 0
    %196 = vmatprep.subr.bf16.mxu0 0
    %197 = vmatpush1.bf16.xpose.msra.mxu0 0
    %198 = vmatprep.subr.bf16.mxu0 0
    %199 = vmatpush1.bf16.xpose.msra.mxu0 0
    %200 = vmatprep.subr.bf16.mxu0 0
    %201 = vmatpush1.bf16.xpose.msra.mxu0 0
    %202 = vmatprep.subr.bf16.mxu0 0
    %203 = vmatpush1.bf16.xpose.msra.mxu0 0
    %204 = vmatprep.subr.bf16.mxu0 0
    %205 = vmatpush1.bf16.xpose.msra.mxu0 0
    %206 = vmatprep.subr.bf16.mxu0 0
    %207 = vmatpush1.bf16.xpose.msra.mxu0 0
    %208 = vmatprep.subr.bf16.mxu0 0
    %209 = vmatpush1.bf16.xpose.msra.mxu0 0
    %210 = vmatprep.subr.bf16.mxu0 0
    %211 = vmatpush1.bf16.xpose.msra.mxu0 0
    %212 = vmatprep.subr.bf16.mxu0 0
    %213 = vmatpush1.bf16.xpose.msra.mxu0 0
    %214 = vmatprep.subr.bf16.mxu0 0
    %215 = vmatpush1.bf16.xpose.msra.mxu0 0
    %216 = vmatprep.subr.bf16.mxu0 0
    %217 = vmatpush1.bf16.xpose.msra.mxu0 0
    %218 = vmatprep.subr.bf16.mxu0 0
    %219 = vmatpush1.bf16.xpose.msra.mxu0 0
    %220 = vmatprep.subr.bf16.mxu0 0
    %221 = vmatpush1.bf16.xpose.msra.mxu0 0
    %222 = vmatprep.subr.bf16.mxu0 0
    %223 = vmatpush1.bf16.xpose.msra.mxu0 0
    %224 = vmatprep.mubr.bf16.mxu0 0
    %225 = vmatmul.mubr.bf16.gmra.mrb[0].mxu0 %v187
    %v226 = vpop.f32.mrb[0].mxu0
    %v227 = vadd.f32 %v43, %v226
    %v228 = vpop.f32.mrb[0].mxu0
    %v229 = vpop.f32.mrb[0].mxu0
    %v230 = vadd.f32 %v44, %v229
    %v231 = vpop.f32.mrb[0].mxu0
    %232 = vdwg.mxu0
    %vm233 = vcmask 130048
    %v234 = vsel %vm233, %v227, -inf
    %235 = vmax.xlane.f32.xlu0 %v234
    %v236 = vpop.xlane.xlu0 %235
    %v237 = vsel %vm233, %v230, -inf
    %238 = vmax.xlane.f32.xlu0 %v237
    %v239 = vpop.xlane.xlu0 %238
    %v240 = vsub.f32 %v227, %v236
    %v241 = vsub.f32 %v230, %v239
    %v242 = vmul.f32 %v240, 1.442695
    %v243 = vpow.pop %v242
    %v244 = vmul.f32 %v241, 1.442695
    %v245 = vpow.pop %v244
    %v246 = vsel %vm233, %v243, 0.0
    %247 = vadd.xlane.f32.xlu0 %v246
    %v248 = vpop.xlane.xlu0 %247
    %v249 = vsel %vm233, %v245, 0.0
    %250 = vadd.xlane.f32.xlu0 %v249
    %v251 = vpop.xlane.xlu0 %250
    %v252 = vrcp.pop %v248
    %v253 = vrcp.pop %v251
    %v254 = vmul.f32 %v243, %v252
    %v255 = vmul.f32 %v245, %v253
    %v256 = vpack.c.bf16 %v255, %v254
    %v258 = vsel %vm233, %v256, 0
    %260 = vmatprep.subr.bf16.mxu0 0
    %261 = vmatpush1.bf16.msra.mxu0 %v181
    %262 = vmatprep.subr.bf16.mxu0 0
    %263 = vmatpush1.bf16.msra.mxu0 0
    %264 = vmatprep.subr.bf16.mxu0 0
    %265 = vmatpush1.bf16.msra.mxu0 0
    %266 = vmatprep.subr.bf16.mxu0 0
    %267 = vmatpush1.bf16.msra.mxu0 0
    %268 = vmatprep.subr.bf16.mxu0 0
    %269 = vmatpush1.bf16.msra.mxu0 0
    %270 = vmatprep.subr.bf16.mxu0 0
    %271 = vmatpush1.bf16.msra.mxu0 0
    %272 = vmatprep.subr.bf16.mxu0 0
    %273 = vmatpush1.bf16.msra.mxu0 0
    %274 = vmatprep.subr.bf16.mxu0 0
    %275 = vmatpush1.bf16.msra.mxu0 0
    %276 = vmatprep.subr.bf16.mxu0 0
    %277 = vmatpush1.bf16.msra.mxu0 0
    %278 = vmatprep.subr.bf16.mxu0 0
    %279 = vmatpush1.bf16.msra.mxu0 0
    %280 = vmatprep.subr.bf16.mxu0 0
    %281 = vmatpush1.bf16.msra.mxu0 0
    %282 = vmatprep.subr.bf16.mxu0 0
    %283 = vmatpush1.bf16.msra.mxu0 0
    %284 = vmatprep.subr.bf16.mxu0 0
    %285 = vmatpush1.bf16.msra.mxu0 0
    %286 = vmatprep.subr.bf16.mxu0 0
    %287 = vmatpush1.bf16.msra.mxu0 0
    %288 = vmatprep.subr.bf16.mxu0 0
    %289 = vmatpush1.bf16.msra.mxu0 0
    %290 = vmatprep.subr.bf16.mxu0 0
    %291 = vmatpush1.bf16.msra.mxu0 0
    %292 = vmatprep.mubr.bf16.mxu0 0
    %293 = vmatmul.mubr.bf16.gmra.mrb[0].mxu0 %v258
    %v294 = vpop.f32.mrb[0].mxu0
    %v295 = vadd.f32 0.0, %v294
    %v296 = vpop.f32.mrb[0].mxu0
    %v297 = vpop.f32.mrb[0].mxu0
    %v298 = vadd.f32 0.0, %v297
    %v299 = vpop.f32.mrb[0].mxu0
    %300 = vdwg.mxu0
    %v301 = vpack.c.bf16 %v298, %v295
    %302 = vrot.lane.b32.xlu0 %v180, 120
    %v303 = vpop.permute.xlu0 %302
    %304 = vrot.lane.b32.xlu0 %v180, 88
    %v305 = vpop.permute.xlu0 %304
    %v307 = vsel %vm185, %v303, 0
    %v310 = vsel %vm185, %v305, 0
    %312 = vmatprep.subr.bf16.mxu0 0
    %313 = vmatpush1.bf16.xpose.msra.mxu0 %v310
    %314 = vmatprep.subr.bf16.mxu0 0
    %315 = vmatpush1.bf16.xpose.msra.mxu0 0
    %316 = vmatprep.subr.bf16.mxu0 0
    %317 = vmatpush1.bf16.xpose.msra.mxu0 0
    %318 = vmatprep.subr.bf16.mxu0 0
    %319 = vmatpush1.bf16.xpose.msra.mxu0 0
    %320 = vmatprep.subr.bf16.mxu0 0
    %321 = vmatpush1.bf16.xpose.msra.mxu0 0
    %322 = vmatprep.subr.bf16.mxu0 0
    %323 = vmatpush1.bf16.xpose.msra.mxu0 0
    %324 = vmatprep.subr.bf16.mxu0 0
    %325 = vmatpush1.bf16.xpose.msra.mxu0 0
    %326 = vmatprep.subr.bf16.mxu0 0
    %327 = vmatpush1.bf16.xpose.msra.mxu0 0
    %328 = vmatprep.subr.bf16.mxu0 0
    %329 = vmatpush1.bf16.xpose.msra.mxu0 0
    %330 = vmatprep.subr.bf16.mxu0 0
    %331 = vmatpush1.bf16.xpose.msra.mxu0 0
    %332 = vmatprep.subr.bf16.mxu0 0
    %333 = vmatpush1.bf16.xpose.msra.mxu0 0
    %334 = vmatprep.subr.bf16.mxu0 0
    %335 = vmatpush1.bf16.xpose.msra.mxu0 0
    %336 = vmatprep.subr.bf16.mxu0 0
    %337 = vmatpush1.bf16.xpose.msra.mxu0 0
    %338 = vmatprep.subr.bf16.mxu0 0
    %339 = vmatpush1.bf16.xpose.msra.mxu0 0
    %340 = vmatprep.subr.bf16.mxu0 0
    %341 = vmatpush1.bf16.xpose.msra.mxu0 0
    %342 = vmatprep.subr.bf16.mxu0 0
    %343 = vmatpush1.bf16.xpose.msra.mxu0 0
    %344 = vmatprep.mubr.bf16.mxu0 0
    %345 = vmatmul.mubr.bf16.gmra.mrb[0].mxu0 %v307
    %v346 = vpop.f32.mrb[0].mxu0
    %v347 = vadd.f32 %v43, %v346
    %v348 = vpop.f32.mrb[0].mxu0
    %v349 = vpop.f32.mrb[0].mxu0
    %v350 = vadd.f32 %v44, %v349
    %v351 = vpop.f32.mrb[0].mxu0
    %352 = vdwg.mxu0
    %v353 = vsel %vm233, %v347, -inf
    %354 = vmax.xlane.f32.xlu0 %v353
    %v355 = vpop.xlane.xlu0 %354
    %v356 = vsel %vm233, %v350, -inf
    %357 = vmax.xlane.f32.xlu0 %v356
    %v358 = vpop.xlane.xlu0 %357
    %v359 = vsub.f32 %v347, %v355
    %v360 = vsub.f32 %v350, %v358
    %v361 = vmul.f32 %v359, 1.442695
    %v362 = vpow.pop %v361
    %v363 = vmul.f32 %v360, 1.442695
    %v364 = vpow.pop %v363
    %v365 = vsel %vm233, %v362, 0.0
    %366 = vadd.xlane.f32.xlu0 %v365
    %v367 = vpop.xlane.xlu0 %366
    %v368 = vsel %vm233, %v364, 0.0
    %369 = vadd.xlane.f32.xlu0 %v368
    %v370 = vpop.xlane.xlu0 %369
    %v371 = vrcp.pop %v367
    %v372 = vrcp.pop %v370
    %v373 = vmul.f32 %v362, %v371
    %v374 = vmul.f32 %v364, %v372
    %v375 = vpack.c.bf16 %v374, %v373
    %377 = vrot.lane.b32.xlu0 %v181, 120
    %v378 = vpop.permute.xlu0 %377
    %v381 = vsel %vm233, %v375, 0
    %383 = vmatprep.subr.bf16.mxu0 0
    %384 = vmatpush1.bf16.msra.mxu0 %v378
    %385 = vmatprep.subr.bf16.mxu0 0
    %386 = vmatpush1.bf16.msra.mxu0 0
    %387 = vmatprep.subr.bf16.mxu0 0
    %388 = vmatpush1.bf16.msra.mxu0 0
    %389 = vmatprep.subr.bf16.mxu0 0
    %390 = vmatpush1.bf16.msra.mxu0 0
    %391 = vmatprep.subr.bf16.mxu0 0
    %392 = vmatpush1.bf16.msra.mxu0 0
    %393 = vmatprep.subr.bf16.mxu0 0
    %394 = vmatpush1.bf16.msra.mxu0 0
    %395 = vmatprep.subr.bf16.mxu0 0
    %396 = vmatpush1.bf16.msra.mxu0 0
    %397 = vmatprep.subr.bf16.mxu0 0
    %398 = vmatpush1.bf16.msra.mxu0 0
    %399 = vmatprep.subr.bf16.mxu0 0
    %400 = vmatpush1.bf16.msra.mxu0 0
    %401 = vmatprep.subr.bf16.mxu0 0
    %402 = vmatpush1.bf16.msra.mxu0 0
    %403 = vmatprep.subr.bf16.mxu0 0
    %404 = vmatpush1.bf16.msra.mxu0 0
    %405 = vmatprep.subr.bf16.mxu0 0
    %406 = vmatpush1.bf16.msra.mxu0 0
    %407 = vmatprep.subr.bf16.mxu0 0
    %408 = vmatpush1.bf16.msra.mxu0 0
    %409 = vmatprep.subr.bf16.mxu0 0
    %410 = vmatpush1.bf16.msra.mxu0 0
    %411 = vmatprep.subr.bf16.mxu0 0
    %412 = vmatpush1.bf16.msra.mxu0 0
    %413 = vmatprep.subr.bf16.mxu0 0
    %414 = vmatpush1.bf16.msra.mxu0 0
    %415 = vmatprep.mubr.bf16.mxu0 0
    %416 = vmatmul.mubr.bf16.gmra.mrb[0].mxu0 %v381
    %v417 = vpop.f32.mrb[0].mxu0
    %v418 = vadd.f32 0.0, %v417
    %v419 = vpop.f32.mrb[0].mxu0
    %v420 = vpop.f32.mrb[0].mxu0
    %v421 = vadd.f32 0.0, %v420
    %v422 = vpop.f32.mrb[0].mxu0
    %423 = vdwg.mxu0
    %v424 = vpack.c.bf16 %v421, %v418
    %v429 = vunpack.c.l.b16 %v174
    %v430 = vunpack.c.l.b16 %v175
    %v431 = vunpack.c.l.b16 %v176
    %v432 = vunpack.c.l.b16 %v177
    %v433 = vpack.c.b16 %v430, %v429
    %v434 = vpack.c.b16 %v432, %v431
    %435 = vrot.lane.b32.xlu0 %v433, 120
    %v436 = vpop.permute.xlu0 %435
    %437 = vrot.lane.b32.xlu0 %v434, 120
    %v438 = vpop.permute.xlu0 %437
    %v440 = vsel %vm185, %v424, 0
    %v443 = vsel %vm185, %v436, 0
    %v446 = vsel %vm185, %v438, 0
    %448 = vmatprep.subr.bf16.mxu0 0
    %449 = vmatpush1.bf16.xpose.msra.mxu0 %v443
    %450 = vmatprep.subr.bf16.mxu0 0
    %451 = vmatpush1.bf16.xpose.msra.mxu0 %v446
    %452 = vmatprep.subr.bf16.mxu0 0
    %453 = vmatpush1.bf16.xpose.msra.mxu0 0
    %454 = vmatprep.subr.bf16.mxu0 0
    %455 = vmatpush1.bf16.xpose.msra.mxu0 0
    %456 = vmatprep.subr.bf16.mxu0 0
    %457 = vmatpush1.bf16.xpose.msra.mxu0 0
    %458 = vmatprep.subr.bf16.mxu0 0
    %459 = vmatpush1.bf16.xpose.msra.mxu0 0
    %460 = vmatprep.subr.bf16.mxu0 0
    %461 = vmatpush1.bf16.xpose.msra.mxu0 0
    %462 = vmatprep.subr.bf16.mxu0 0
    %463 = vmatpush1.bf16.xpose.msra.mxu0 0
    %464 = vmatprep.subr.bf16.mxu0 0
    %465 = vmatpush1.bf16.xpose.msra.mxu0 0
    %466 = vmatprep.subr.bf16.mxu0 0
    %467 = vmatpush1.bf16.xpose.msra.mxu0 0
    %468 = vmatprep.subr.bf16.mxu0 0
    %469 = vmatpush1.bf16.xpose.msra.mxu0 0
    %470 = vmatprep.subr.bf16.mxu0 0
    %471 = vmatpush1.bf16.xpose.msra.mxu0 0
    %472 = vmatprep.subr.bf16.mxu0 0
    %473 = vmatpush1.bf16.xpose.msra.mxu0 0
    %474 = vmatprep.subr.bf16.mxu0 0
    %475 = vmatpush1.bf16.xpose.msra.mxu0 0
    %476 = vmatprep.subr.bf16.mxu0 0
    %477 = vmatpush1.bf16.xpose.msra.mxu0 0
    %478 = vmatprep.subr.bf16.mxu0 0
    %479 = vmatpush1.bf16.xpose.msra.mxu0 0
    %480 = vmatprep.mubr.bf16.mxu0 0
    %481 = vmatmul.mubr.bf16.gmra.mrb[0].mxu0 %v440
    %v482 = vpop.f32.mrb[0].mxu0
    %v483 = vadd.f32 0.0, %v482
    %v484 = vpop.f32.mrb[0].mxu0
    %v485 = vpop.f32.mrb[0].mxu0
    %v486 = vadd.f32 0.0, %v485
    %v487 = vpop.f32.mrb[0].mxu0
    %488 = vdwg.mxu0
    %v490 = vsel %vm185, %v301, 0
    %v493 = vsel %vm185, %v433, 0
    %v496 = vsel %vm185, %v434, 0
    %498 = vmatprep.subr.bf16.mxu0 0
    %499 = vmatpush1.bf16.xpose.msra.mxu0 %v493
    %500 = vmatprep.subr.bf16.mxu0 0
    %501 = vmatpush1.bf16.xpose.msra.mxu0 %v496
    %502 = vmatprep.subr.bf16.mxu0 0
    %503 = vmatpush1.bf16.xpose.msra.mxu0 0
    %504 = vmatprep.subr.bf16.mxu0 0
    %505 = vmatpush1.bf16.xpose.msra.mxu0 0
    %506 = vmatprep.subr.bf16.mxu0 0
    %507 = vmatpush1.bf16.xpose.msra.mxu0 0
    %508 = vmatprep.subr.bf16.mxu0 0
    %509 = vmatpush1.bf16.xpose.msra.mxu0 0
    %510 = vmatprep.subr.bf16.mxu0 0
    %511 = vmatpush1.bf16.xpose.msra.mxu0 0
    %512 = vmatprep.subr.bf16.mxu0 0
    %513 = vmatpush1.bf16.xpose.msra.mxu0 0
    %514 = vmatprep.subr.bf16.mxu0 0
    %515 = vmatpush1.bf16.xpose.msra.mxu0 0
    %516 = vmatprep.subr.bf16.mxu0 0
    %517 = vmatpush1.bf16.xpose.msra.mxu0 0
    %518 = vmatprep.subr.bf16.mxu0 0
    %519 = vmatpush1.bf16.xpose.msra.mxu0 0
    %520 = vmatprep.subr.bf16.mxu0 0
    %521 = vmatpush1.bf16.xpose.msra.mxu0 0
    %522 = vmatprep.subr.bf16.mxu0 0
    %523 = vmatpush1.bf16.xpose.msra.mxu0 0
    %524 = vmatprep.subr.bf16.mxu0 0
    %525 = vmatpush1.bf16.xpose.msra.mxu0 0
    %526 = vmatprep.subr.bf16.mxu0 0
    %527 = vmatpush1.bf16.xpose.msra.mxu0 0
    %528 = vmatprep.subr.bf16.mxu0 0
    %529 = vmatpush1.bf16.xpose.msra.mxu0 0
    %530 = vmatprep.mubr.bf16.mxu0 0
    %531 = vmatmul.mubr.bf16.gmra.mrb[0].mxu0 %v490
    %v532 = vpop.f32.mrb[0].mxu0
    %v533 = vadd.f32 %v483, %v532
    %v534 = vpop.f32.mrb[0].mxu0
    %v535 = vpop.f32.mrb[0].mxu0
    %v536 = vadd.f32 %v486, %v535
    %v537 = vpop.f32.mrb[0].mxu0
    %538 = vdwg.mxu0
    %539 = vrot.lane.b32.xlu0 %v180, 112
    %v540 = vpop.permute.xlu0 %539
    %541 = vrot.lane.b32.xlu0 %v180, 80
    %v542 = vpop.permute.xlu0 %541
    %v544 = vsel %vm185, %v540, 0
    %v547 = vsel %vm185, %v542, 0
    %549 = vmatprep.subr.bf16.mxu0 0
    %550 = vmatpush1.bf16.xpose.msra.mxu0 %v547
    %551 = vmatprep.subr.bf16.mxu0 0
    %552 = vmatpush1.bf16.xpose.msra.mxu0 0
    %553 = vmatprep.subr.bf16.mxu0 0
    %554 = vmatpush1.bf16.xpose.msra.mxu0 0
    %555 = vmatprep.subr.bf16.mxu0 0
    %556 = vmatpush1.bf16.xpose.msra.mxu0 0
    %557 = vmatprep.subr.bf16.mxu0 0
    %558 = vmatpush1.bf16.xpose.msra.mxu0 0
    %559 = vmatprep.subr.bf16.mxu0 0
    %560 = vmatpush1.bf16.xpose.msra.mxu0 0
    %561 = vmatprep.subr.bf16.mxu0 0
    %562 = vmatpush1.bf16.xpose.msra.mxu0 0
    %563 = vmatprep.subr.bf16.mxu0 0
    %564 = vmatpush1.bf16.xpose.msra.mxu0 0
    %565 = vmatprep.subr.bf16.mxu0 0
    %566 = vmatpush1.bf16.xpose.msra.mxu0 0
    %567 = vmatprep.subr.bf16.mxu0 0
    %568 = vmatpush1.bf16.xpose.msra.mxu0 0
    %569 = vmatprep.subr.bf16.mxu0 0
    %570 = vmatpush1.bf16.xpose.msra.mxu0 0
    %571 = vmatprep.subr.bf16.mxu0 0
    %572 = vmatpush1.bf16.xpose.msra.mxu0 0
    %573 = vmatprep.subr.bf16.mxu0 0
    %574 = vmatpush1.bf16.xpose.msra.mxu0 0
    %575 = vmatprep.subr.bf16.mxu0 0
    %576 = vmatpush1.bf16.xpose.msra.mxu0 0
    %577 = vmatprep.subr.bf16.mxu0 0
    %578 = vmatpush1.bf16.xpose.msra.mxu0 0
    %579 = vmatprep.subr.bf16.mxu0 0
    %580 = vmatpush1.bf16.xpose.msra.mxu0 0
    %581 = vmatprep.mubr.bf16.mxu0 0
    %582 = vmatmul.mubr.bf16.gmra.mrb[0].mxu0 %v544
    %v583 = vpop.f32.mrb[0].mxu0
    %v584 = vadd.f32 %v43, %v583
    %v585 = vpop.f32.mrb[0].mxu0
    %v586 = vpop.f32.mrb[0].mxu0
    %v587 = vadd.f32 %v44, %v586
    %v588 = vpop.f32.mrb[0].mxu0
    %589 = vdwg.mxu0
    %v590 = vsel %vm233, %v584, -inf
    %591 = vmax.xlane.f32.xlu0 %v590
    %v592 = vpop.xlane.xlu0 %591
    %v593 = vsel %vm233, %v587, -inf
    %594 = vmax.xlane.f32.xlu0 %v593
    %v595 = vpop.xlane.xlu0 %594
    %v596 = vsub.f32 %v584, %v592
    %v597 = vsub.f32 %v587, %v595
    %v598 = vmul.f32 %v596, 1.442695
    %v599 = vpow.pop %v598
    %v600 = vmul.f32 %v597, 1.442695
    %v601 = vpow.pop %v600
    %v602 = vsel %vm233, %v599, 0.0
    %603 = vadd.xlane.f32.xlu0 %v602
    %v604 = vpop.xlane.xlu0 %603
    %v605 = vsel %vm233, %v601, 0.0
    %606 = vadd.xlane.f32.xlu0 %v605
    %v607 = vpop.xlane.xlu0 %606
    %v608 = vrcp.pop %v604
    %v609 = vrcp.pop %v607
    %v610 = vmul.f32 %v599, %v608
    %v611 = vmul.f32 %v601, %v609
    %v612 = vpack.c.bf16 %v611, %v610
    %613 = vrot.lane.b32.xlu0 %v181, 112
    %v614 = vpop.permute.xlu0 %613
    %v617 = vsel %vm233, %v612, 0
    %619 = vmatprep.subr.bf16.mxu0 0
    %620 = vmatpush1.bf16.msra.mxu0 %v614
    %621 = vmatprep.subr.bf16.mxu0 0
    %622 = vmatpush1.bf16.msra.mxu0 0
    %623 = vmatprep.subr.bf16.mxu0 0
    %624 = vmatpush1.bf16.msra.mxu0 0
    %625 = vmatprep.subr.bf16.mxu0 0
    %626 = vmatpush1.bf16.msra.mxu0 0
    %627 = vmatprep.subr.bf16.mxu0 0
    %628 = vmatpush1.bf16.msra.mxu0 0
    %629 = vmatprep.subr.bf16.mxu0 0
    %630 = vmatpush1.bf16.msra.mxu0 0
    %631 = vmatprep.subr.bf16.mxu0 0
    %632 = vmatpush1.bf16.msra.mxu0 0
    %633 = vmatprep.subr.bf16.mxu0 0
    %634 = vmatpush1.bf16.msra.mxu0 0
    %635 = vmatprep.subr.bf16.mxu0 0
    %636 = vmatpush1.bf16.msra.mxu0 0
    %637 = vmatprep.subr.bf16.mxu0 0
    %638 = vmatpush1.bf16.msra.mxu0 0
    %639 = vmatprep.subr.bf16.mxu0 0
    %640 = vmatpush1.bf16.msra.mxu0 0
    %641 = vmatprep.subr.bf16.mxu0 0
    %642 = vmatpush1.bf16.msra.mxu0 0
    %643 = vmatprep.subr.bf16.mxu0 0
    %644 = vmatpush1.bf16.msra.mxu0 0
    %645 = vmatprep.subr.bf16.mxu0 0
    %646 = vmatpush1.bf16.msra.mxu0 0
    %647 = vmatprep.subr.bf16.mxu0 0
    %648 = vmatpush1.bf16.msra.mxu0 0
    %649 = vmatprep.subr.bf16.mxu0 0
    %650 = vmatpush1.bf16.msra.mxu0 0
    %651 = vmatprep.mubr.bf16.mxu0 0
    %652 = vmatmul.mubr.bf16.gmra.mrb[0].mxu0 %v617
    %v653 = vpop.f32.mrb[0].mxu0
    %v654 = vadd.f32 0.0, %v653
    %v655 = vpop.f32.mrb[0].mxu0
    %v656 = vpop.f32.mrb[0].mxu0
    %v657 = vadd.f32 0.0, %v656
    %v658 = vpop.f32.mrb[0].mxu0
    %659 = vdwg.mxu0
    %v660 = vpack.c.bf16 %v657, %v654
    %661 = vrot.lane.b32.xlu0 %v433, 112
    %v662 = vpop.permute.xlu0 %661
    %663 = vrot.lane.b32.xlu0 %v434, 112
    %v664 = vpop.permute.xlu0 %663
    %v666 = vsel %vm185, %v660, 0
    %v669 = vsel %vm185, %v662, 0
    %v672 = vsel %vm185, %v664, 0
    %674 = vmatprep.subr.bf16.mxu0 0
    %675 = vmatpush1.bf16.xpose.msra.mxu0 %v669
    %676 = vmatprep.subr.bf16.mxu0 0
    %677 = vmatpush1.bf16.xpose.msra.mxu0 %v672
    %678 = vmatprep.subr.bf16.mxu0 0
    %679 = vmatpush1.bf16.xpose.msra.mxu0 0
    %680 = vmatprep.subr.bf16.mxu0 0
    %681 = vmatpush1.bf16.xpose.msra.mxu0 0
    %682 = vmatprep.subr.bf16.mxu0 0
    %683 = vmatpush1.bf16.xpose.msra.mxu0 0
    %684 = vmatprep.subr.bf16.mxu0 0
    %685 = vmatpush1.bf16.xpose.msra.mxu0 0
    %686 = vmatprep.subr.bf16.mxu0 0
    %687 = vmatpush1.bf16.xpose.msra.mxu0 0
    %688 = vmatprep.subr.bf16.mxu0 0
    %689 = vmatpush1.bf16.xpose.msra.mxu0 0
    %690 = vmatprep.subr.bf16.mxu0 0
    %691 = vmatpush1.bf16.xpose.msra.mxu0 0
    %692 = vmatprep.subr.bf16.mxu0 0
    %693 = vmatpush1.bf16.xpose.msra.mxu0 0
    %694 = vmatprep.subr.bf16.mxu0 0
    %695 = vmatpush1.bf16.xpose.msra.mxu0 0
    %696 = vmatprep.subr.bf16.mxu0 0
    %697 = vmatpush1.bf16.xpose.msra.mxu0 0
    %698 = vmatprep.subr.bf16.mxu0 0
    %699 = vmatpush1.bf16.xpose.msra.mxu0 0
    %700 = vmatprep.subr.bf16.mxu0 0
    %701 = vmatpush1.bf16.xpose.msra.mxu0 0
    %702 = vmatprep.subr.bf16.mxu0 0
    %703 = vmatpush1.bf16.xpose.msra.mxu0 0
    %704 = vmatprep.subr.bf16.mxu0 0
    %705 = vmatpush1.bf16.xpose.msra.mxu0 0
    %706 = vmatprep.mubr.bf16.mxu0 0
    %707 = vmatmul.mubr.bf16.gmra.mrb[0].mxu0 %v666
    %v708 = vpop.f32.mrb[0].mxu0
    %v709 = vadd.f32 0.0, %v708
    %v710 = vpop.f32.mrb[0].mxu0
    %v711 = vpop.f32.mrb[0].mxu0
    %v712 = vadd.f32 0.0, %v711
    %v713 = vpop.f32.mrb[0].mxu0
    %714 = vdwg.mxu0
    %v715 = vadd.f32 %v533, %v709
    %v716 = vadd.f32 %v536, %v712
    %717 = vrot.lane.b32.xlu0 %v180, 104
    %v718 = vpop.permute.xlu0 %717
    %719 = vrot.lane.b32.xlu0 %v180, 72
    %v720 = vpop.permute.xlu0 %719
    %v722 = vsel %vm185, %v718, 0
    %v725 = vsel %vm185, %v720, 0
    %727 = vmatprep.subr.bf16.mxu0 0
    %728 = vmatpush1.bf16.xpose.msra.mxu0 %v725
    %729 = vmatprep.subr.bf16.mxu0 0
    %730 = vmatpush1.bf16.xpose.msra.mxu0 0
    %731 = vmatprep.subr.bf16.mxu0 0
    %732 = vmatpush1.bf16.xpose.msra.mxu0 0
    %733 = vmatprep.subr.bf16.mxu0 0
    %734 = vmatpush1.bf16.xpose.msra.mxu0 0
    %735 = vmatprep.subr.bf16.mxu0 0
    %736 = vmatpush1.bf16.xpose.msra.mxu0 0
    %737 = vmatprep.subr.bf16.mxu0 0
    %738 = vmatpush1.bf16.xpose.msra.mxu0 0
    %739 = vmatprep.subr.bf16.mxu0 0
    %740 = vmatpush1.bf16.xpose.msra.mxu0 0
    %741 = vmatprep.subr.bf16.mxu0 0
    %742 = vmatpush1.bf16.xpose.msra.mxu0 0
    %743 = vmatprep.subr.bf16.mxu0 0
    %744 = vmatpush1.bf16.xpose.msra.mxu0 0
    %745 = vmatprep.subr.bf16.mxu0 0
    %746 = vmatpush1.bf16.xpose.msra.mxu0 0
    %747 = vmatprep.subr.bf16.mxu0 0
    %748 = vmatpush1.bf16.xpose.msra.mxu0 0
    %749 = vmatprep.subr.bf16.mxu0 0
    %750 = vmatpush1.bf16.xpose.msra.mxu0 0
    %751 = vmatprep.subr.bf16.mxu0 0
    %752 = vmatpush1.bf16.xpose.msra.mxu0 0
    %753 = vmatprep.subr.bf16.mxu0 0
    %754 = vmatpush1.bf16.xpose.msra.mxu0 0
    %755 = vmatprep.subr.bf16.mxu0 0
    %756 = vmatpush1.bf16.xpose.msra.mxu0 0
    %757 = vmatprep.subr.bf16.mxu0 0
    %758 = vmatpush1.bf16.xpose.msra.mxu0 0
    %759 = vmatprep.mubr.bf16.mxu0 0
    %760 = vmatmul.mubr.bf16.gmra.mrb[0].mxu0 %v722
    %v761 = vpop.f32.mrb[0].mxu0
    %v762 = vadd.f32 %v43, %v761
    %v763 = vpop.f32.mrb[0].mxu0
    %v764 = vpop.f32.mrb[0].mxu0
    %v765 = vadd.f32 %v44, %v764
    %v766 = vpop.f32.mrb[0].mxu0
    %767 = vdwg.mxu0
    %v768 = vsel %vm233, %v762, -inf
    %769 = vmax.xlane.f32.xlu0 %v768
    %v770 = vpop.xlane.xlu0 %769
    %v771 = vsel %vm233, %v765, -inf
    %772 = vmax.xlane.f32.xlu0 %v771
    %v773 = vpop.xlane.xlu0 %772
    %v774 = vsub.f32 %v762, %v770
    %v775 = vsub.f32 %v765, %v773
    %v776 = vmul.f32 %v774, 1.442695
    %v777 = vpow.pop %v776
    %v778 = vmul.f32 %v775, 1.442695
    %v779 = vpow.pop %v778
    %v780 = vsel %vm233, %v777, 0.0
    %781 = vadd.xlane.f32.xlu0 %v780
    %v782 = vpop.xlane.xlu0 %781
    %v783 = vsel %vm233, %v779, 0.0
    %784 = vadd.xlane.f32.xlu0 %v783
    %v785 = vpop.xlane.xlu0 %784
    %v786 = vrcp.pop %v782
    %v787 = vrcp.pop %v785
    %v788 = vmul.f32 %v777, %v786
    %v789 = vmul.f32 %v779, %v787
    %v790 = vpack.c.bf16 %v789, %v788
    %791 = vrot.lane.b32.xlu0 %v181, 104
    %v792 = vpop.permute.xlu0 %791
    %v795 = vsel %vm233, %v790, 0
    %797 = vmatprep.subr.bf16.mxu0 0
    %798 = vmatpush1.bf16.msra.mxu0 %v792
    %799 = vmatprep.subr.bf16.mxu0 0
    %800 = vmatpush1.bf16.msra.mxu0 0
    %801 = vmatprep.subr.bf16.mxu0 0
    %802 = vmatpush1.bf16.msra.mxu0 0
    %803 = vmatprep.subr.bf16.mxu0 0
    %804 = vmatpush1.bf16.msra.mxu0 0
    %805 = vmatprep.subr.bf16.mxu0 0
    %806 = vmatpush1.bf16.msra.mxu0 0
    %807 = vmatprep.subr.bf16.mxu0 0
    %808 = vmatpush1.bf16.msra.mxu0 0
    %809 = vmatprep.subr.bf16.mxu0 0
    %810 = vmatpush1.bf16.msra.mxu0 0
    %811 = vmatprep.subr.bf16.mxu0 0
    %812 = vmatpush1.bf16.msra.mxu0 0
    %813 = vmatprep.subr.bf16.mxu0 0
    %814 = vmatpush1.bf16.msra.mxu0 0
    %815 = vmatprep.subr.bf16.mxu0 0
    %816 = vmatpush1.bf16.msra.mxu0 0
    %817 = vmatprep.subr.bf16.mxu0 0
    %818 = vmatpush1.bf16.msra.mxu0 0
    %819 = vmatprep.subr.bf16.mxu0 0
    %820 = vmatpush1.bf16.msra.mxu0 0
    %821 = vmatprep.subr.bf16.mxu0 0
    %822 = vmatpush1.bf16.msra.mxu0 0
    %823 = vmatprep.subr.bf16.mxu0 0
    %824 = vmatpush1.bf16.msra.mxu0 0
    %825 = vmatprep.subr.bf16.mxu0 0
    %826 = vmatpush1.bf16.msra.mxu0 0
    %827 = vmatprep.subr.bf16.mxu0 0
    %828 = vmatpush1.bf16.msra.mxu0 0
    %829 = vmatprep.mubr.bf16.mxu0 0
    %830 = vmatmul.mubr.bf16.gmra.mrb[0].mxu0 %v795
    %v831 = vpop.f32.mrb[0].mxu0
    %v832 = vadd.f32 0.0, %v831
    %v833 = vpop.f32.mrb[0].mxu0
    %v834 = vpop.f32.mrb[0].mxu0
    %v835 = vadd.f32 0.0, %v834
    %v836 = vpop.f32.mrb[0].mxu0
    %837 = vdwg.mxu0
    %v838 = vpack.c.bf16 %v835, %v832
    %839 = vrot.lane.b32.xlu0 %v433, 104
    %v840 = vpop.permute.xlu0 %839
    %841 = vrot.lane.b32.xlu0 %v434, 104
    %v842 = vpop.permute.xlu0 %841
    %v844 = vsel %vm185, %v838, 0
    %v847 = vsel %vm185, %v840, 0
    %v850 = vsel %vm185, %v842, 0
    %852 = vmatprep.subr.bf16.mxu0 0
    %853 = vmatpush1.bf16.xpose.msra.mxu0 %v847
    %854 = vmatprep.subr.bf16.mxu0 0
    %855 = vmatpush1.bf16.xpose.msra.mxu0 %v850
    %856 = vmatprep.subr.bf16.mxu0 0
    %857 = vmatpush1.bf16.xpose.msra.mxu0 0
    %858 = vmatprep.subr.bf16.mxu0 0
    %859 = vmatpush1.bf16.xpose.msra.mxu0 0
    %860 = vmatprep.subr.bf16.mxu0 0
    %861 = vmatpush1.bf16.xpose.msra.mxu0 0
    %862 = vmatprep.subr.bf16.mxu0 0
    %863 = vmatpush1.bf16.xpose.msra.mxu0 0
    %864 = vmatprep.subr.bf16.mxu0 0
    %865 = vmatpush1.bf16.xpose.msra.mxu0 0
    %866 = vmatprep.subr.bf16.mxu0 0
    %867 = vmatpush1.bf16.xpose.msra.mxu0 0
    %868 = vmatprep.subr.bf16.mxu0 0
    %869 = vmatpush1.bf16.xpose.msra.mxu0 0
    %870 = vmatprep.subr.bf16.mxu0 0
    %871 = vmatpush1.bf16.xpose.msra.mxu0 0
    %872 = vmatprep.subr.bf16.mxu0 0
    %873 = vmatpush1.bf16.xpose.msra.mxu0 0
    %874 = vmatprep.subr.bf16.mxu0 0
    %875 = vmatpush1.bf16.xpose.msra.mxu0 0
    %876 = vmatprep.subr.bf16.mxu0 0
    %877 = vmatpush1.bf16.xpose.msra.mxu0 0
    %878 = vmatprep.subr.bf16.mxu0 0
    %879 = vmatpush1.bf16.xpose.msra.mxu0 0
    %880 = vmatprep.subr.bf16.mxu0 0
    %881 = vmatpush1.bf16.xpose.msra.mxu0 0
    %882 = vmatprep.subr.bf16.mxu0 0
    %883 = vmatpush1.bf16.xpose.msra.mxu0 0
    %884 = vmatprep.mubr.bf16.mxu0 0
    %885 = vmatmul.mubr.bf16.gmra.mrb[0].mxu0 %v844
    %v886 = vpop.f32.mrb[0].mxu0
    %v887 = vadd.f32 0.0, %v886
    %v888 = vpop.f32.mrb[0].mxu0
    %v889 = vpop.f32.mrb[0].mxu0
    %v890 = vadd.f32 0.0, %v889
    %v891 = vpop.f32.mrb[0].mxu0
    %892 = vdwg.mxu0
    %v893 = vadd.f32 %v715, %v887
    %v894 = vadd.f32 %v716, %v890
    %v895 = vadd.f32 %v893, %v178
    %v896 = vadd.f32 %v894, %v179
    %v897 = vadd.f32 %v31, %v895
    %v898 = vadd.f32 %v32, %v896
    %v899 = vld [vmem:[%s7 + $0x30] sm:$0xff]
    %v900 = vld [vmem:[%s7 + $0x38] sm:$0xff]
    %v901 = vld [vmem:[%s7 + $0x40] sm:$0xff]
    %v902 = vld [vmem:[%s7 + $0x48] sm:$0xff]
    %v903 = vsel %vm66, %v897, 0.0
    %904 = vadd.xlane.f32.xlu0 %v903
    %v905 = vpop.xlane.xlu0 %904
    %v906 = vsel %vm66, %v898, 0.0
    %907 = vadd.xlane.f32.xlu0 %v906
    %v908 = vpop.xlane.xlu0 %907
    %v909 = vrcp.pop 32.0
    %v910 = vmul.f32 %v905, %v909
    %v911 = vmul.f32 %v908, %v909
    %v912 = vmul.f32 %v897, %v897
    %v913 = vmul.f32 %v898, %v898
    %v914 = vsel %vm66, %v912, 0.0
    %915 = vadd.xlane.f32.xlu0 %v914
    %v916 = vpop.xlane.xlu0 %915
    %v917 = vsel %vm66, %v913, 0.0
    %918 = vadd.xlane.f32.xlu0 %v917
    %v919 = vpop.xlane.xlu0 %918
    %v920 = vmul.f32 %v916, %v909
    %v921 = vmul.f32 %v919, %v909
    %v922 = vmul.f32 %v910, %v910
    %v923 = vmul.f32 %v911, %v911
    %v924 = vsub.f32 %v920, %v922
    %v925 = vsub.f32 %v921, %v923
    %v926 = vadd.f32 %v924, 1e-05
    %v927 = vadd.f32 %v925, 1e-05
    %v928 = vrsqrt.pop %v926
    %v929 = vrsqrt.pop %v927
    %v930 = vsub.f32 %v897, %v910
    %v931 = vsub.f32 %v898, %v911
    %v932 = vmul.f32 %v899, %v928
    %v933 = vmul.f32 %v900, %v929
    %v934 = vmul.f32 %v930, %v932
    %v935 = vmul.f32 %v931, %v933
    %v936 = vadd.f32 %v934, %v901
    %v937 = vadd.f32 %v935, %v902
    %v938 = vld [vmem:[%s6 + $0x30] sm:$0xf]
    %v939 = vld [vmem:[%s6 + $0x34] sm:$0xf]
    %v940 = vld [vmem:[%s6 + $0x38] sm:$0xf]
    %v941 = vld [vmem:[%s6 + $0x3c] sm:$0xf]
    %v942 = vpack.c.bf16 %v42, %v41
    %v943 = vld [vmem:[%s7 + $0x50] sm:$0xff]
    %v944 = vld [vmem:[%s7 + $0x58] sm:$0xff]
    %v949 = vunpack.c.l.b16 %v938
    %v950 = vunpack.c.l.b16 %v939
    %v951 = vunpack.c.l.b16 %v940
    %v952 = vunpack.c.l.b16 %v941
    %v953 = vpack.c.b16 %v950, %v949
    %v954 = vpack.c.b16 %v952, %v951
    %v958 = vsel %vm66, %v942, 0
    %960 = vmatprep.subr.bf16.mxu0 0
    %961 = vmatpush1.bf16.msra.mxu0 %v953
    %962 = vmatprep.subr.bf16.mxu0 0
    %963 = vmatpush1.bf16.msra.mxu0 %v954
    %964 = vmatprep.subr.bf16.mxu0 0
    %965 = vmatpush1.bf16.msra.mxu0 0
    %966 = vmatprep.subr.bf16.mxu0 0
    %967 = vmatpush1.bf16.msra.mxu0 0
    %968 = vmatprep.subr.bf16.mxu0 0
    %969 = vmatpush1.bf16.msra.mxu0 0
    %970 = vmatprep.subr.bf16.mxu0 0
    %971 = vmatpush1.bf16.msra.mxu0 0
    %972 = vmatprep.subr.bf16.mxu0 0
    %973 = vmatpush1.bf16.msra.mxu0 0
    %974 = vmatprep.subr.bf16.mxu0 0
    %975 = vmatpush1.bf16.msra.mxu0 0
    %976 = vmatprep.subr.bf16.mxu0 0
    %977 = vmatpush1.bf16.msra.mxu0 0
    %978 = vmatprep.subr.bf16.mxu0 0
    %979 = vmatpush1.bf16.msra.mxu0 0
    %980 = vmatprep.subr.bf16.mxu0 0
    %981 = vmatpush1.bf16.msra.mxu0 0
    %982 = vmatprep.subr.bf16.mxu0 0
    %983 = vmatpush1.bf16.msra.mxu0 0
    %984 = vmatprep.subr.bf16.mxu0 0
    %985 = vmatpush1.bf16.msra.mxu0 0
    %986 = vmatprep.subr.bf16.mxu0 0
    %987 = vmatpush1.bf16.msra.mxu0 0
    %988 = vmatprep.subr.bf16.mxu0 0
    %989 = vmatpush1.bf16.msra.mxu0 0
    %990 = vmatprep.subr.bf16.mxu0 0
    %991 = vmatpush1.bf16.msra.mxu0 0
    %992 = vmatprep.mubr.bf16.mxu0 0
    %993 = vmatmul.mubr.bf16.gmra.mrb[0].mxu0 %v958
    %v994 = vpop.f32.mrb[0].mxu0
    %v995 = vadd.f32 %v943, %v994
    %v996 = vpop.f32.mrb[0].mxu0
    %v997 = vpop.f32.mrb[0].mxu0
    %v998 = vadd.f32 %v944, %v997
    %v999 = vpop.f32.mrb[0].mxu0
    %1000 = vdwg.mxu0
    %v1001 = vld [vmem:[%s6 + $0x40] sm:$0xf]
    %v1002 = vld [vmem:[%s6 + $0x44] sm:$0xf]
    %v1003 = vld [vmem:[%s6 + $0x48] sm:$0xf]
    %v1004 = vld [vmem:[%s6 + $0x4c] sm:$0xf]
    %v1005 = vpack.c.bf16 %v937, %v936
    %v1006 = vld [vmem:[%s7 + $0x60] sm:$0xff]
    %v1007 = vld [vmem:[%s7 + $0x68] sm:$0xff]
    %v1012 = vunpack.c.l.b16 %v1001
    %v1013 = vunpack.c.l.b16 %v1002
    %v1014 = vunpack.c.l.b16 %v1003
    %v1015 = vunpack.c.l.b16 %v1004
    %v1016 = vpack.c.b16 %v1013, %v1012
    %v1017 = vpack.c.b16 %v1015, %v1014
    %v1021 = vsel %vm66, %v1005, 0
    %1023 = vmatprep.subr.bf16.mxu0 0
    %1024 = vmatpush1.bf16.msra.mxu0 %v1016
    %1025 = vmatprep.subr.bf16.mxu0 0
    %1026 = vmatpush1.bf16.msra.mxu0 %v1017
    %1027 = vmatprep.subr.bf16.mxu0 0
    %1028 = vmatpush1.bf16.msra.mxu0 0
    %1029 = vmatprep.subr.bf16.mxu0 0
    %1030 = vmatpush1.bf16.msra.mxu0 0
    %1031 = vmatprep.subr.bf16.mxu0 0
    %1032 = vmatpush1.bf16.msra.mxu0 0
    %1033 = vmatprep.subr.bf16.mxu0 0
    %1034 = vmatpush1.bf16.msra.mxu0 0
    %1035 = vmatprep.subr.bf16.mxu0 0
    %1036 = vmatpush1.bf16.msra.mxu0 0
    %1037 = vmatprep.subr.bf16.mxu0 0
    %1038 = vmatpush1.bf16.msra.mxu0 0
    %1039 = vmatprep.subr.bf16.mxu0 0
    %1040 = vmatpush1.bf16.msra.mxu0 0
    %1041 = vmatprep.subr.bf16.mxu0 0
    %1042 = vmatpush1.bf16.msra.mxu0 0
    %1043 = vmatprep.subr.bf16.mxu0 0
    %1044 = vmatpush1.bf16.msra.mxu0 0
    %1045 = vmatprep.subr.bf16.mxu0 0
    %1046 = vmatpush1.bf16.msra.mxu0 0
    %1047 = vmatprep.subr.bf16.mxu0 0
    %1048 = vmatpush1.bf16.msra.mxu0 0
    %1049 = vmatprep.subr.bf16.mxu0 0
    %1050 = vmatpush1.bf16.msra.mxu0 0
    %1051 = vmatprep.subr.bf16.mxu0 0
    %1052 = vmatpush1.bf16.msra.mxu0 0
    %1053 = vmatprep.subr.bf16.mxu0 0
    %1054 = vmatpush1.bf16.msra.mxu0 0
    %1055 = vmatprep.mubr.bf16.mxu0 0
    %1056 = vmatmul.mubr.bf16.gmra.mrb[0].mxu0 %v1021
    %v1057 = vpop.f32.mrb[0].mxu0
    %v1058 = vadd.f32 %v1006, %v1057
    %v1059 = vpop.f32.mrb[0].mxu0
    %v1060 = vpop.f32.mrb[0].mxu0
    %v1061 = vadd.f32 %v1007, %v1060
    %v1062 = vpop.f32.mrb[0].mxu0
    %1063 = vdwg.mxu0
    %v1064 = vld [vmem:[%s6 + $0x50] sm:$0xf]
    %v1065 = vld [vmem:[%s6 + $0x54] sm:$0xf]
    %v1066 = vld [vmem:[%s6 + $0x58] sm:$0xf]
    %v1067 = vld [vmem:[%s6 + $0x5c] sm:$0xf]
    %v1068 = vld [vmem:[%s7 + $0x70] sm:$0xff]
    %v1069 = vld [vmem:[%s7 + $0x78] sm:$0xff]
    %v1070 = vpack.c.bf16 %v998, %v995
    %v1071 = vpack.c.bf16 %v1061, %v1058
    %1072 = vrot.lane.b32.xlu0 %v180, 64
    %v1073 = vpop.permute.xlu0 %1072
    %v1075 = vsel %vm185, %v1070, 0
    %v1078 = vsel %vm185, %v1073, 0
    %1080 = vmatprep.subr.bf16.mxu0 0
    %1081 = vmatpush1.bf16.xpose.msra.mxu0 %v1078
    %1082 = vmatprep.subr.bf16.mxu0 0
    %1083 = vmatpush1.bf16.xpose.msra.mxu0 0
    %1084 = vmatprep.subr.bf16.mxu0 0
    %1085 = vmatpush1.bf16.xpose.msra.mxu0 0
    %1086 = vmatprep.subr.bf16.mxu0 0
    %1087 = vmatpush1.bf16.xpose.msra.mxu0 0
    %1088 = vmatprep.subr.bf16.mxu0 0
    %1089 = vmatpush1.bf16.xpose.msra.mxu0 0
    %1090 = vmatprep.subr.bf16.mxu0 0
    %1091 = vmatpush1.bf16.xpose.msra.mxu0 0
    %1092 = vmatprep.subr.bf16.mxu0 0
    %1093 = vmatpush1.bf16.xpose.msra.mxu0 0
    %1094 = vmatprep.subr.bf16.mxu0 0
    %1095 = vmatpush1.bf16.xpose.msra.mxu0 0
    %1096 = vmatprep.subr.bf16.mxu0 0
    %1097 = vmatpush1.bf16.xpose.msra.mxu0 0
    %1098 = vmatprep.subr.bf16.mxu0 0
    %1099 = vmatpush1.bf16.xpose.msra.mxu0 0
    %1100 = vmatprep.subr.bf16.mxu0 0
    %1101 = vmatpush1.bf16.xpose.msra.mxu0 0
    %1102 = vmatprep.subr.bf16.mxu0 0
    %1103 = vmatpush1.bf16.xpose.msra.mxu0 0
    %1104 = vmatprep.subr.bf16.mxu0 0
    %1105 = vmatpush1.bf16.xpose.msra.mxu0 0
    %1106 = vmatprep.subr.bf16.mxu0 0
    %1107 = vmatpush1.bf16.xpose.msra.mxu0 0
    %1108 = vmatprep.subr.bf16.mxu0 0
    %1109 = vmatpush1.bf16.xpose.msra.mxu0 0
    %1110 = vmatprep.subr.bf16.mxu0 0
    %1111 = vmatpush1.bf16.xpose.msra.mxu0 0
    %1112 = vmatprep.mubr.bf16.mxu0 0
    %1113 = vmatmul.mubr.bf16.gmra.mrb[0].mxu0 %v1075
    %v1114 = vpop.f32.mrb[0].mxu0
    %v1115 = vadd.f32 %v45, %v1114
    %v1116 = vpop.f32.mrb[0].mxu0
    %v1117 = vpop.f32.mrb[0].mxu0
    %v1118 = vadd.f32 %v46, %v1117
    %v1119 = vpop.f32.mrb[0].mxu0
    %1120 = vdwg.mxu0
    %v1121 = vsel %vm233, %v1115, -inf
    %1122 = vmax.xlane.f32.xlu0 %v1121
    %v1123 = vpop.xlane.xlu0 %1122
    %v1124 = vsel %vm233, %v1118, -inf
    %1125 = vmax.xlane.f32.xlu0 %v1124
    %v1126 = vpop.xlane.xlu0 %1125
    %v1127 = vsub.f32 %v1115, %v1123
    %v1128 = vsub.f32 %v1118, %v1126
    %v1129 = vmul.f32 %v1127, 1.442695
    %v1130 = vpow.pop %v1129
    %v1131 = vmul.f32 %v1128, 1.442695
    %v1132 = vpow.pop %v1131
    %v1133 = vsel %vm233, %v1130, 0.0
    %1134 = vadd.xlane.f32.xlu0 %v1133
    %v1135 = vpop.xlane.xlu0 %1134
    %v1136 = vsel %vm233, %v1132, 0.0
    %1137 = vadd.xlane.f32.xlu0 %v1136
    %v1138 = vpop.xlane.xlu0 %1137
    %v1139 = vrcp.pop %v1135
    %v1140 = vrcp.pop %v1138
    %v1141 = vmul.f32 %v1130, %v1139
    %v1142 = vmul.f32 %v1132, %v1140
    %v1143 = vpack.c.bf16 %v1142, %v1141
    %v1145 = vsel %vm233, %v1143, 0
    %1147 = vmatprep.subr.bf16.mxu0 0
    %1148 = vmatpush1.bf16.msra.mxu0 %v1071
    %1149 = vmatprep.subr.bf16.mxu0 0
    %1150 = vmatpush1.bf16.msra.mxu0 0
    %1151 = vmatprep.subr.bf16.mxu0 0
    %1152 = vmatpush1.bf16.msra.mxu0 0
    %1153 = vmatprep.subr.bf16.mxu0 0
    %1154 = vmatpush1.bf16.msra.mxu0 0
    %1155 = vmatprep.subr.bf16.mxu0 0
    %1156 = vmatpush1.bf16.msra.mxu0 0
    %1157 = vmatprep.subr.bf16.mxu0 0
    %1158 = vmatpush1.bf16.msra.mxu0 0
    %1159 = vmatprep.subr.bf16.mxu0 0
    %1160 = vmatpush1.bf16.msra.mxu0 0
    %1161 = vmatprep.subr.bf16.mxu0 0
    %1162 = vmatpush1.bf16.msra.mxu0 0
    %1163 = vmatprep.subr.bf16.mxu0 0
    %1164 = vmatpush1.bf16.msra.mxu0 0
    %1165 = vmatprep.subr.bf16.mxu0 0
    %1166 = vmatpush1.bf16.msra.mxu0 0
    %1167 = vmatprep.subr.bf16.mxu0 0
    %1168 = vmatpush1.bf16.msra.mxu0 0
    %1169 = vmatprep.subr.bf16.mxu0 0
    %1170 = vmatpush1.bf16.msra.mxu0 0
    %1171 = vmatprep.subr.bf16.mxu0 0
    %1172 = vmatpush1.bf16.msra.mxu0 0
    %1173 = vmatprep.subr.bf16.mxu0 0
    %1174 = vmatpush1.bf16.msra.mxu0 0
    %1175 = vmatprep.subr.bf16.mxu0 0
    %1176 = vmatpush1.bf16.msra.mxu0 0
    %1177 = vmatprep.subr.bf16.mxu0 0
    %1178 = vmatpush1.bf16.msra.mxu0 0
    %1179 = vmatprep.mubr.bf16.mxu0 0
    %1180 = vmatmul.mubr.bf16.gmra.mrb[0].mxu0 %v1145
    %v1181 = vpop.f32.mrb[0].mxu0
    %v1182 = vadd.f32 0.0, %v1181
    %v1183 = vpop.f32.mrb[0].mxu0
    %v1184 = vpop.f32.mrb[0].mxu0
    %v1185 = vadd.f32 0.0, %v1184
    %v1186 = vpop.f32.mrb[0].mxu0
    %1187 = vdwg.mxu0
    %v1188 = vpack.c.bf16 %v1185, %v1182
    %1190 = vrot.lane.b32.xlu0 %v1070, 120
    %v1191 = vpop.permute.xlu0 %1190
    %1192 = vrot.lane.b32.xlu0 %v180, 56
    %v1193 = vpop.permute.xlu0 %1192
    %v1195 = vsel %vm185, %v1191, 0
    %v1198 = vsel %vm185, %v1193, 0
    %1200 = vmatprep.subr.bf16.mxu0 0
    %1201 = vmatpush1.bf16.xpose.msra.mxu0 %v1198
    %1202 = vmatprep.subr.bf16.mxu0 0
    %1203 = vmatpush1.bf16.xpose.msra.mxu0 0
    %1204 = vmatprep.subr.bf16.mxu0 0
    %1205 = vmatpush1.bf16.xpose.msra.mxu0 0
    %1206 = vmatprep.subr.bf16.mxu0 0
    %1207 = vmatpush1.bf16.xpose.msra.mxu0 0
    %1208 = vmatprep.subr.bf16.mxu0 0
    %1209 = vmatpush1.bf16.xpose.msra.mxu0 0
    %1210 = vmatprep.subr.bf16.mxu0 0
    %1211 = vmatpush1.bf16.xpose.msra.mxu0 0
    %1212 = vmatprep.subr.bf16.mxu0 0
    %1213 = vmatpush1.bf16.xpose.msra.mxu0 0
    %1214 = vmatprep.subr.bf16.mxu0 0
    %1215 = vmatpush1.bf16.xpose.msra.mxu0 0
    %1216 = vmatprep.subr.bf16.mxu0 0
    %1217 = vmatpush1.bf16.xpose.msra.mxu0 0
    %1218 = vmatprep.subr.bf16.mxu0 0
    %1219 = vmatpush1.bf16.xpose.msra.mxu0 0
    %1220 = vmatprep.subr.bf16.mxu0 0
    %1221 = vmatpush1.bf16.xpose.msra.mxu0 0
    %1222 = vmatprep.subr.bf16.mxu0 0
    %1223 = vmatpush1.bf16.xpose.msra.mxu0 0
    %1224 = vmatprep.subr.bf16.mxu0 0
    %1225 = vmatpush1.bf16.xpose.msra.mxu0 0
    %1226 = vmatprep.subr.bf16.mxu0 0
    %1227 = vmatpush1.bf16.xpose.msra.mxu0 0
    %1228 = vmatprep.subr.bf16.mxu0 0
    %1229 = vmatpush1.bf16.xpose.msra.mxu0 0
    %1230 = vmatprep.subr.bf16.mxu0 0
    %1231 = vmatpush1.bf16.xpose.msra.mxu0 0
    %1232 = vmatprep.mubr.bf16.mxu0 0
    %1233 = vmatmul.mubr.bf16.gmra.mrb[0].mxu0 %v1195
    %v1234 = vpop.f32.mrb[0].mxu0
    %v1235 = vadd.f32 %v45, %v1234
    %v1236 = vpop.f32.mrb[0].mxu0
    %v1237 = vpop.f32.mrb[0].mxu0
    %v1238 = vadd.f32 %v46, %v1237
    %v1239 = vpop.f32.mrb[0].mxu0
    %1240 = vdwg.mxu0
    %v1241 = vsel %vm233, %v1235, -inf
    %1242 = vmax.xlane.f32.xlu0 %v1241
    %v1243 = vpop.xlane.xlu0 %1242
    %v1244 = vsel %vm233, %v1238, -inf
    %1245 = vmax.xlane.f32.xlu0 %v1244
    %v1246 = vpop.xlane.xlu0 %1245
    %v1247 = vsub.f32 %v1235, %v1243
    %v1248 = vsub.f32 %v1238, %v1246
    %v1249 = vmul.f32 %v1247, 1.442695
    %v1250 = vpow.pop %v1249
    %v1251 = vmul.f32 %v1248, 1.442695
    %v1252 = vpow.pop %v1251
    %v1253 = vsel %vm233, %v1250, 0.0
    %1254 = vadd.xlane.f32.xlu0 %v1253
    %v1255 = vpop.xlane.xlu0 %1254
    %v1256 = vsel %vm233, %v1252, 0.0
    %1257 = vadd.xlane.f32.xlu0 %v1256
    %v1258 = vpop.xlane.xlu0 %1257
    %v1259 = vrcp.pop %v1255
    %v1260 = vrcp.pop %v1258
    %v1261 = vmul.f32 %v1250, %v1259
    %v1262 = vmul.f32 %v1252, %v1260
    %v1263 = vpack.c.bf16 %v1262, %v1261
    %1265 = vrot.lane.b32.xlu0 %v1071, 120
    %v1266 = vpop.permute.xlu0 %1265
    %v1269 = vsel %vm233, %v1263, 0
    %1271 = vmatprep.subr.bf16.mxu0 0
    %1272 = vmatpush1.bf16.msra.mxu0 %v1266
    %1273 = vmatprep.subr.bf16.mxu0 0
    %1274 = vmatpush1.bf16.msra.mxu0 0
    %1275 = vmatprep.subr.bf16.mxu0 0
    %1276 = vmatpush1.bf16.msra.mxu0 0
    %1277 = vmatprep.subr.bf16.mxu0 0
    %1278 = vmatpush1.bf16.msra.mxu0 0
    %1279 = vmatprep.subr.bf16.mxu0 0
    %1280 = vmatpush1.bf16.msra.mxu0 0
    %1281 = vmatprep.subr.bf16.mxu0 0
    %1282 = vmatpush1.bf16.msra.mxu0 0
    %1283 = vmatprep.subr.bf16.mxu0 0
    %1284 = vmatpush1.bf16.msra.mxu0 0
    %1285 = vmatprep.subr.bf16.mxu0 0
    %1286 = vmatpush1.bf16.msra.mxu0 0
    %1287 = vmatprep.subr.bf16.mxu0 0
    %1288 = vmatpush1.bf16.msra.mxu0 0
    %1289 = vmatprep.subr.bf16.mxu0 0
    %1290 = vmatpush1.bf16.msra.mxu0 0
    %1291 = vmatprep.subr.bf16.mxu0 0
    %1292 = vmatpush1.bf16.msra.mxu0 0
    %1293 = vmatprep.subr.bf16.mxu0 0
    %1294 = vmatpush1.bf16.msra.mxu0 0
    %1295 = vmatprep.subr.bf16.mxu0 0
    %1296 = vmatpush1.bf16.msra.mxu0 0
    %1297 = vmatprep.subr.bf16.mxu0 0
    %1298 = vmatpush1.bf16.msra.mxu0 0
    %1299 = vmatprep.subr.bf16.mxu0 0
    %1300 = vmatpush1.bf16.msra.mxu0 0
    %1301 = vmatprep.subr.bf16.mxu0 0
    %1302 = vmatpush1.bf16.msra.mxu0 0
    %1303 = vmatprep.mubr.bf16.mxu0 0
    %1304 = vmatmul.mubr.bf16.gmra.mrb[0].mxu0 %v1269
    %v1305 = vpop.f32.mrb[0].mxu0
    %v1306 = vadd.f32 0.0, %v1305
    %v1307 = vpop.f32.mrb[0].mxu0
    %v1308 = vpop.f32.mrb[0].mxu0
    %v1309 = vadd.f32 0.0, %v1308
    %v1310 = vpop.f32.mrb[0].mxu0
    %1311 = vdwg.mxu0
    %v1312 = vpack.c.bf16 %v1309, %v1306
    %v1317 = vunpack.c.l.b16 %v1064
    %v1318 = vunpack.c.l.b16 %v1065
    %v1319 = vunpack.c.l.b16 %v1066
    %v1320 = vunpack.c.l.b16 %v1067
    %v1321 = vpack.c.b16 %v1318, %v1317
    %v1322 = vpack.c.b16 %v1320, %v1319
    %1323 = vrot.lane.b32.xlu0 %v1321, 120
    %v1324 = vpop.permute.xlu0 %1323
    %1325 = vrot.lane.b32.xlu0 %v1322, 120
    %v1326 = vpop.permute.xlu0 %1325
    %v1328 = vsel %vm185, %v1312, 0
    %v1331 = vsel %vm185, %v1324, 0
    %v1334 = vsel %vm185, %v1326, 0
    %1336 = vmatprep.subr.bf16.mxu0 0
    %1337 = vmatpush1.bf16.xpose.msra.mxu0 %v1331
    %1338 = vmatprep.subr.bf16.mxu0 0
    %1339 = vmatpush1.bf16.xpose.msra.mxu0 %v1334
    %1340 = vmatprep.subr.bf16.mxu0 0
    %1341 = vmatpush1.bf16.xpose.msra.mxu0 0
    %1342 = vmatprep.subr.bf16.mxu0 0
    %1343 = vmatpush1.bf16.xpose.msra.mxu0 0
    %1344 = vmatprep.subr.bf16.mxu0 0
    %1345 = vmatpush1.bf16.xpose.msra.mxu0 0
    %1346 = vmatprep.subr.bf16.mxu0 0
    %1347 = vmatpush1.bf16.xpose.msra.mxu0 0
    %1348 = vmatprep.subr.bf16.mxu0 0
    %1349 = vmatpush1.bf16.xpose.msra.mxu0 0
    %1350 = vmatprep.subr.bf16.mxu0 0
    %1351 = vmatpush1.bf16.xpose.msra.mxu0 0
    %1352 = vmatprep.subr.bf16.mxu0 0
    %1353 = vmatpush1.bf16.xpose.msra.mxu0 0
    %1354 = vmatprep.subr.bf16.mxu0 0
    %1355 = vmatpush1.bf16.xpose.msra.mxu0 0
    %1356 = vmatprep.subr.bf16.mxu0 0
    %1357 = vmatpush1.bf16.xpose.msra.mxu0 0
    %1358 = vmatprep.subr.bf16.mxu0 0
    %1359 = vmatpush1.bf16.xpose.msra.mxu0 0
    %1360 = vmatprep.subr.bf16.mxu0 0
    %1361 = vmatpush1.bf16.xpose.msra.mxu0 0
    %1362 = vmatprep.subr.bf16.mxu0 0
    %1363 = vmatpush1.bf16.xpose.msra.mxu0 0
    %1364 = vmatprep.subr.bf16.mxu0 0
    %1365 = vmatpush1.bf16.xpose.msra.mxu0 0
    %1366 = vmatprep.subr.bf16.mxu0 0
    %1367 = vmatpush1.bf16.xpose.msra.mxu0 0
    %1368 = vmatprep.mubr.bf16.mxu0 0
    %1369 = vmatmul.mubr.bf16.gmra.mrb[0].mxu0 %v1328
    %v1370 = vpop.f32.mrb[0].mxu0
    %v1371 = vadd.f32 0.0, %v1370
    %v1372 = vpop.f32.mrb[0].mxu0
    %v1373 = vpop.f32.mrb[0].mxu0
    %v1374 = vadd.f32 0.0, %v1373
    %v1375 = vpop.f32.mrb[0].mxu0
    %1376 = vdwg.mxu0
    %v1378 = vsel %vm185, %v1188, 0
    %v1381 = vsel %vm185, %v1321, 0
    %v1384 = vsel %vm185, %v1322, 0
    %1386 = vmatprep.subr.bf16.mxu0 0
    %1387 = vmatpush1.bf16.xpose.msra.mxu0 %v1381
    %1388 = vmatprep.subr.bf16.mxu0 0
    %1389 = vmatpush1.bf16.xpose.msra.mxu0 %v1384
    %1390 = vmatprep.subr.bf16.mxu0 0
    %1391 = vmatpush1.bf16.xpose.msra.mxu0 0
    %1392 = vmatprep.subr.bf16.mxu0 0
    %1393 = vmatpush1.bf16.xpose.msra.mxu0 0
    %1394 = vmatprep.subr.bf16.mxu0 0
    %1395 = vmatpush1.bf16.xpose.msra.mxu0 0
    %1396 = vmatprep.subr.bf16.mxu0 0
    %1397 = vmatpush1.bf16.xpose.msra.mxu0 0
    %1398 = vmatprep.subr.bf16.mxu0 0
    %1399 = vmatpush1.bf16.xpose.msra.mxu0 0
    %1400 = vmatprep.subr.bf16.mxu0 0
    %1401 = vmatpush1.bf16.xpose.msra.mxu0 0
    %1402 = vmatprep.subr.bf16.mxu0 0
    %1403 = vmatpush1.bf16.xpose.msra.mxu0 0
    %1404 = vmatprep.subr.bf16.mxu0 0
    %1405 = vmatpush1.bf16.xpose.msra.mxu0 0
    %1406 = vmatprep.subr.bf16.mxu0 0
    %1407 = vmatpush1.bf16.xpose.msra.mxu0 0
    %1408 = vmatprep.subr.bf16.mxu0 0
    %1409 = vmatpush1.bf16.xpose.msra.mxu0 0
    %1410 = vmatprep.subr.bf16.mxu0 0
    %1411 = vmatpush1.bf16.xpose.msra.mxu0 0
    %1412 = vmatprep.subr.bf16.mxu0 0
    %1413 = vmatpush1.bf16.xpose.msra.mxu0 0
    %1414 = vmatprep.subr.bf16.mxu0 0
    %1415 = vmatpush1.bf16.xpose.msra.mxu0 0
    %1416 = vmatprep.subr.bf16.mxu0 0
    %1417 = vmatpush1.bf16.xpose.msra.mxu0 0
    %1418 = vmatprep.mubr.bf16.mxu0 0
    %1419 = vmatmul.mubr.bf16.gmra.mrb[0].mxu0 %v1378
    %v1420 = vpop.f32.mrb[0].mxu0
    %v1421 = vadd.f32 %v1371, %v1420
    %v1422 = vpop.f32.mrb[0].mxu0
    %v1423 = vpop.f32.mrb[0].mxu0
    %v1424 = vadd.f32 %v1374, %v1423
    %v1425 = vpop.f32.mrb[0].mxu0
    %1426 = vdwg.mxu0
    %1427 = vrot.lane.b32.xlu0 %v1070, 112
    %v1428 = vpop.permute.xlu0 %1427
    %1429 = vrot.lane.b32.xlu0 %v180, 48
    %v1430 = vpop.permute.xlu0 %1429
    %v1432 = vsel %vm185, %v1428, 0
    %v1435 = vsel %vm185, %v1430, 0
    %1437 = vmatprep.subr.bf16.mxu0 0
    %1438 = vmatpush1.bf16.xpose.msra.mxu0 %v1435
    %1439 = vmatprep.subr.bf16.mxu0 0
    %1440 = vmatpush1.bf16.xpose.msra.mxu0 0
    %1441 = vmatprep.subr.bf16.mxu0 0
    %1442 = vmatpush1.bf16.xpose.msra.mxu0 0
    %1443 = vmatprep.subr.bf16.mxu0 0
    %1444 = vmatpush1.bf16.xpose.msra.mxu0 0
    %1445 = vmatprep.subr.bf16.mxu0 0
    %1446 = vmatpush1.bf16.xpose.msra.mxu0 0
    %1447 = vmatprep.subr.bf16.mxu0 0
    %1448 = vmatpush1.bf16.xpose.msra.mxu0 0
    %1449 = vmatprep.subr.bf16.mxu0 0
    %1450 = vmatpush1.bf16.xpose.msra.mxu0 0
    %1451 = vmatprep.subr.bf16.mxu0 0
    %1452 = vmatpush1.bf16.xpose.msra.mxu0 0
    %1453 = vmatprep.subr.bf16.mxu0 0
    %1454 = vmatpush1.bf16.xpose.msra.mxu0 0
    %1455 = vmatprep.subr.bf16.mxu0 0
    %1456 = vmatpush1.bf16.xpose.msra.mxu0 0
    %1457 = vmatprep.subr.bf16.mxu0 0
    %1458 = vmatpush1.bf16.xpose.msra.mxu0 0
    %1459 = vmatprep.subr.bf16.mxu0 0
    %1460 = vmatpush1.bf16.xpose.msra.mxu0 0
    %1461 = vmatprep.subr.bf16.mxu0 0
    %1462 = vmatpush1.bf16.xpose.msra.mxu0 0
    %1463 = vmatprep.subr.bf16.mxu0 0
    %1464 = vmatpush1.bf16.xpose.msra.mxu0 0
    %1465 = vmatprep.subr.bf16.mxu0 0
    %1466 = vmatpush1.bf16.xpose.msra.mxu0 0
    %1467 = vmatprep.subr.bf16.mxu0 0
    %1468 = vmatpush1.bf16.xpose.msra.mxu0 0
    %1469 = vmatprep.mubr.bf16.mxu0 0
    %1470 = vmatmul.mubr.bf16.gmra.mrb[0].mxu0 %v1432
    %v1471 = vpop.f32.mrb[0].mxu0
    %v1472 = vadd.f32 %v45, %v1471
    %v1473 = vpop.f32.mrb[0].mxu0
    %v1474 = vpop.f32.mrb[0].mxu0
    %v1475 = vadd.f32 %v46, %v1474
    %v1476 = vpop.f32.mrb[0].mxu0
    %1477 = vdwg.mxu0
    %v1478 = vsel %vm233, %v1472, -inf
    %1479 = vmax.xlane.f32.xlu0 %v1478
    %v1480 = vpop.xlane.xlu0 %1479
    %v1481 = vsel %vm233, %v1475, -inf
    %1482 = vmax.xlane.f32.xlu0 %v1481
    %v1483 = vpop.xlane.xlu0 %1482
    %v1484 = vsub.f32 %v1472, %v1480
    %v1485 = vsub.f32 %v1475, %v1483
    %v1486 = vmul.f32 %v1484, 1.442695
    %v1487 = vpow.pop %v1486
    %v1488 = vmul.f32 %v1485, 1.442695
    %v1489 = vpow.pop %v1488
    %v1490 = vsel %vm233, %v1487, 0.0
    %1491 = vadd.xlane.f32.xlu0 %v1490
    %v1492 = vpop.xlane.xlu0 %1491
    %v1493 = vsel %vm233, %v1489, 0.0
    %1494 = vadd.xlane.f32.xlu0 %v1493
    %v1495 = vpop.xlane.xlu0 %1494
    %v1496 = vrcp.pop %v1492
    %v1497 = vrcp.pop %v1495
    %v1498 = vmul.f32 %v1487, %v1496
    %v1499 = vmul.f32 %v1489, %v1497
    %v1500 = vpack.c.bf16 %v1499, %v1498
    %1501 = vrot.lane.b32.xlu0 %v1071, 112
    %v1502 = vpop.permute.xlu0 %1501
    %v1505 = vsel %vm233, %v1500, 0
    %1507 = vmatprep.subr.bf16.mxu0 0
    %1508 = vmatpush1.bf16.msra.mxu0 %v1502
    %1509 = vmatprep.subr.bf16.mxu0 0
    %1510 = vmatpush1.bf16.msra.mxu0 0
    %1511 = vmatprep.subr.bf16.mxu0 0
    %1512 = vmatpush1.bf16.msra.mxu0 0
    %1513 = vmatprep.subr.bf16.mxu0 0
    %1514 = vmatpush1.bf16.msra.mxu0 0
    %1515 = vmatprep.subr.bf16.mxu0 0
    %1516 = vmatpush1.bf16.msra.mxu0 0
    %1517 = vmatprep.subr.bf16.mxu0 0
    %1518 = vmatpush1.bf16.msra.mxu0 0
    %1519 = vmatprep.subr.bf16.mxu0 0
    %1520 = vmatpush1.bf16.msra.mxu0 0
    %1521 = vmatprep.subr.bf16.mxu0 0
    %1522 = vmatpush1.bf16.msra.mxu0 0
    %1523 = vmatprep.subr.bf16.mxu0 0
    %1524 = vmatpush1.bf16.msra.mxu0 0
    %1525 = vmatprep.subr.bf16.mxu0 0
    %1526 = vmatpush1.bf16.msra.mxu0 0
    %1527 = vmatprep.subr.bf16.mxu0 0
    %1528 = vmatpush1.bf16.msra.mxu0 0
    %1529 = vmatprep.subr.bf16.mxu0 0
    %1530 = vmatpush1.bf16.msra.mxu0 0
    %1531 = vmatprep.subr.bf16.mxu0 0
    %1532 = vmatpush1.bf16.msra.mxu0 0
    %1533 = vmatprep.subr.bf16.mxu0 0
    %1534 = vmatpush1.bf16.msra.mxu0 0
    %1535 = vmatprep.subr.bf16.mxu0 0
    %1536 = vmatpush1.bf16.msra.mxu0 0
    %1537 = vmatprep.subr.bf16.mxu0 0
    %1538 = vmatpush1.bf16.msra.mxu0 0
    %1539 = vmatprep.mubr.bf16.mxu0 0
    %1540 = vmatmul.mubr.bf16.gmra.mrb[0].mxu0 %v1505
    %v1541 = vpop.f32.mrb[0].mxu0
    %v1542 = vadd.f32 0.0, %v1541
    %v1543 = vpop.f32.mrb[0].mxu0
    %v1544 = vpop.f32.mrb[0].mxu0
    %v1545 = vadd.f32 0.0, %v1544
    %v1546 = vpop.f32.mrb[0].mxu0
    %1547 = vdwg.mxu0
    %v1548 = vpack.c.bf16 %v1545, %v1542
    %1549 = vrot.lane.b32.xlu0 %v1321, 112
    %v1550 = vpop.permute.xlu0 %1549
    %1551 = vrot.lane.b32.xlu0 %v1322, 112
    %v1552 = vpop.permute.xlu0 %1551
    %v1554 = vsel %vm185, %v1548, 0
    %v1557 = vsel %vm185, %v1550, 0
    %v1560 = vsel %vm185, %v1552, 0
    %1562 = vmatprep.subr.bf16.mxu0 0
    %1563 = vmatpush1.bf16.xpose.msra.mxu0 %v1557
    %1564 = vmatprep.subr.bf16.mxu0 0
    %1565 = vmatpush1.bf16.xpose.msra.mxu0 %v1560
    %1566 = vmatprep.subr.bf16.mxu0 0
    %1567 = vmatpush1.bf16.xpose.msra.mxu0 0
    %1568 = vmatprep.subr.bf16.mxu0 0
    %1569 = vmatpush1.bf16.xpose.msra.mxu0 0
    %1570 = vmatprep.subr.bf16.mxu0 0
    %1571 = vmatpush1.bf16.xpose.msra.mxu0 0
    %1572 = vmatprep.subr.bf16.mxu0 0
    %1573 = vmatpush1.bf16.xpose.msra.mxu0 0
    %1574 = vmatprep.subr.bf16.mxu0 0
    %1575 = vmatpush1.bf16.xpose.msra.mxu0 0
    %1576 = vmatprep.subr.bf16.mxu0 0
    %1577 = vmatpush1.bf16.xpose.msra.mxu0 0
    %1578 = vmatprep.subr.bf16.mxu0 0
    %1579 = vmatpush1.bf16.xpose.msra.mxu0 0
    %1580 = vmatprep.subr.bf16.mxu0 0
    %1581 = vmatpush1.bf16.xpose.msra.mxu0 0
    %1582 = vmatprep.subr.bf16.mxu0 0
    %1583 = vmatpush1.bf16.xpose.msra.mxu0 0
    %1584 = vmatprep.subr.bf16.mxu0 0
    %1585 = vmatpush1.bf16.xpose.msra.mxu0 0
    %1586 = vmatprep.subr.bf16.mxu0 0
    %1587 = vmatpush1.bf16.xpose.msra.mxu0 0
    %1588 = vmatprep.subr.bf16.mxu0 0
    %1589 = vmatpush1.bf16.xpose.msra.mxu0 0
    %1590 = vmatprep.subr.bf16.mxu0 0
    %1591 = vmatpush1.bf16.xpose.msra.mxu0 0
    %1592 = vmatprep.subr.bf16.mxu0 0
    %1593 = vmatpush1.bf16.xpose.msra.mxu0 0
    %1594 = vmatprep.mubr.bf16.mxu0 0
    %1595 = vmatmul.mubr.bf16.gmra.mrb[0].mxu0 %v1554
    %v1596 = vpop.f32.mrb[0].mxu0
    %v1597 = vadd.f32 0.0, %v1596
    %v1598 = vpop.f32.mrb[0].mxu0
    %v1599 = vpop.f32.mrb[0].mxu0
    %v1600 = vadd.f32 0.0, %v1599
    %v1601 = vpop.f32.mrb[0].mxu0
    %1602 = vdwg.mxu0
    %v1603 = vadd.f32 %v1421, %v1597
    %v1604 = vadd.f32 %v1424, %v1600
    %1605 = vrot.lane.b32.xlu0 %v1070, 104
    %v1606 = vpop.permute.xlu0 %1605
    %1607 = vrot.lane.b32.xlu0 %v180, 40
    %v1608 = vpop.permute.xlu0 %1607
    %v1610 = vsel %vm185, %v1606, 0
    %v1613 = vsel %vm185, %v1608, 0
    %1615 = vmatprep.subr.bf16.mxu0 0
    %1616 = vmatpush1.bf16.xpose.msra.mxu0 %v1613
    %1617 = vmatprep.subr.bf16.mxu0 0
    %1618 = vmatpush1.bf16.xpose.msra.mxu0 0
    %1619 = vmatprep.subr.bf16.mxu0 0
    %1620 = vmatpush1.bf16.xpose.msra.mxu0 0
    %1621 = vmatprep.subr.bf16.mxu0 0
    %1622 = vmatpush1.bf16.xpose.msra.mxu0 0
    %1623 = vmatprep.subr.bf16.mxu0 0
    %1624 = vmatpush1.bf16.xpose.msra.mxu0 0
    %1625 = vmatprep.subr.bf16.mxu0 0
    %1626 = vmatpush1.bf16.xpose.msra.mxu0 0
    %1627 = vmatprep.subr.bf16.mxu0 0
    %1628 = vmatpush1.bf16.xpose.msra.mxu0 0
    %1629 = vmatprep.subr.bf16.mxu0 0
    %1630 = vmatpush1.bf16.xpose.msra.mxu0 0
    %1631 = vmatprep.subr.bf16.mxu0 0
    %1632 = vmatpush1.bf16.xpose.msra.mxu0 0
    %1633 = vmatprep.subr.bf16.mxu0 0
    %1634 = vmatpush1.bf16.xpose.msra.mxu0 0
    %1635 = vmatprep.subr.bf16.mxu0 0
    %1636 = vmatpush1.bf16.xpose.msra.mxu0 0
    %1637 = vmatprep.subr.bf16.mxu0 0
    %1638 = vmatpush1.bf16.xpose.msra.mxu0 0
    %1639 = vmatprep.subr.bf16.mxu0 0
    %1640 = vmatpush1.bf16.xpose.msra.mxu0 0
    %1641 = vmatprep.subr.bf16.mxu0 0
    %1642 = vmatpush1.bf16.xpose.msra.mxu0 0
    %1643 = vmatprep.subr.bf16.mxu0 0
    %1644 = vmatpush1.bf16.xpose.msra.mxu0 0
    %1645 = vmatprep.subr.bf16.mxu0 0
    %1646 = vmatpush1.bf16.xpose.msra.mxu0 0
    %1647 = vmatprep.mubr.bf16.mxu0 0
    %1648 = vmatmul.mubr.bf16.gmra.mrb[0].mxu0 %v1610
    %v1649 = vpop.f32.mrb[0].mxu0
    %v1650 = vadd.f32 %v45, %v1649
    %v1651 = vpop.f32.mrb[0].mxu0
    %v1652 = vpop.f32.mrb[0].mxu0
    %v1653 = vadd.f32 %v46, %v1652
    %v1654 = vpop.f32.mrb[0].mxu0
    %1655 = vdwg.mxu0
    %v1656 = vsel %vm233, %v1650, -inf
    %1657 = vmax.xlane.f32.xlu0 %v1656
    %v1658 = vpop.xlane.xlu0 %1657
    %v1659 = vsel %vm233, %v1653, -inf
    %1660 = vmax.xlane.f32.xlu0 %v1659
    %v1661 = vpop.xlane.xlu0 %1660
    %v1662 = vsub.f32 %v1650, %v1658
    %v1663 = vsub.f32 %v1653, %v1661
    %v1664 = vmul.f32 %v1662, 1.442695
    %v1665 = vpow.pop %v1664
    %v1666 = vmul.f32 %v1663, 1.442695
    %v1667 = vpow.pop %v1666
    %v1668 = vsel %vm233, %v1665, 0.0
    %1669 = vadd.xlane.f32.xlu0 %v1668
    %v1670 = vpop.xlane.xlu0 %1669
    %v1671 = vsel %vm233, %v1667, 0.0
    %1672 = vadd.xlane.f32.xlu0 %v1671
    %v1673 = vpop.xlane.xlu0 %1672
    %v1674 = vrcp.pop %v1670
    %v1675 = vrcp.pop %v1673
    %v1676 = vmul.f32 %v1665, %v1674
    %v1677 = vmul.f32 %v1667, %v1675
    %v1678 = vpack.c.bf16 %v1677, %v1676
    %1679 = vrot.lane.b32.xlu0 %v1071, 104
    %v1680 = vpop.permute.xlu0 %1679
    %v1683 = vsel %vm233, %v1678, 0
    %1685 = vmatprep.subr.bf16.mxu0 0
    %1686 = vmatpush1.bf16.msra.mxu0 %v1680
    %1687 = vmatprep.subr.bf16.mxu0 0
    %1688 = vmatpush1.bf16.msra.mxu0 0
    %1689 = vmatprep.subr.bf16.mxu0 0
    %1690 = vmatpush1.bf16.msra.mxu0 0
    %1691 = vmatprep.subr.bf16.mxu0 0
    %1692 = vmatpush1.bf16.msra.mxu0 0
    %1693 = vmatprep.subr.bf16.mxu0 0
    %1694 = vmatpush1.bf16.msra.mxu0 0
    %1695 = vmatprep.subr.bf16.mxu0 0
    %1696 = vmatpush1.bf16.msra.mxu0 0
    %1697 = vmatprep.subr.bf16.mxu0 0
    %1698 = vmatpush1.bf16.msra.mxu0 0
    %1699 = vmatprep.subr.bf16.mxu0 0
    %1700 = vmatpush1.bf16.msra.mxu0 0
    %1701 = vmatprep.subr.bf16.mxu0 0
    %1702 = vmatpush1.bf16.msra.mxu0 0
    %1703 = vmatprep.subr.bf16.mxu0 0
    %1704 = vmatpush1.bf16.msra.mxu0 0
    %1705 = vmatprep.subr.bf16.mxu0 0
    %1706 = vmatpush1.bf16.msra.mxu0 0
    %1707 = vmatprep.subr.bf16.mxu0 0
    %1708 = vmatpush1.bf16.msra.mxu0 0
    %1709 = vmatprep.subr.bf16.mxu0 0
    %1710 = vmatpush1.bf16.msra.mxu0 0
    %1711 = vmatprep.subr.bf16.mxu0 0
    %1712 = vmatpush1.bf16.msra.mxu0 0
    %1713 = vmatprep.subr.bf16.mxu0 0
    %1714 = vmatpush1.bf16.msra.mxu0 0
    %1715 = vmatprep.subr.bf16.mxu0 0
    %1716 = vmatpush1.bf16.msra.mxu0 0
    %1717 = vmatprep.mubr.bf16.mxu0 0
    %1718 = vmatmul.mubr.bf16.gmra.mrb[0].mxu0 %v1683
    %v1719 = vpop.f32.mrb[0].mxu0
    %v1720 = vadd.f32 0.0, %v1719
    %v1721 = vpop.f32.mrb[0].mxu0
    %v1722 = vpop.f32.mrb[0].mxu0
    %v1723 = vadd.f32 0.0, %v1722
    %v1724 = vpop.f32.mrb[0].mxu0
    %1725 = vdwg.mxu0
    %v1726 = vpack.c.bf16 %v1723, %v1720
    %1727 = vrot.lane.b32.xlu0 %v1321, 104
    %v1728 = vpop.permute.xlu0 %1727
    %1729 = vrot.lane.b32.xlu0 %v1322, 104
    %v1730 = vpop.permute.xlu0 %1729
    %v1732 = vsel %vm185, %v1726, 0
    %v1735 = vsel %vm185, %v1728, 0
    %v1738 = vsel %vm185, %v1730, 0
    %1740 = vmatprep.subr.bf16.mxu0 0
    %1741 = vmatpush1.bf16.xpose.msra.mxu0 %v1735
    %1742 = vmatprep.subr.bf16.mxu0 0
    %1743 = vmatpush1.bf16.xpose.msra.mxu0 %v1738
    %1744 = vmatprep.subr.bf16.mxu0 0
    %1745 = vmatpush1.bf16.xpose.msra.mxu0 0
    %1746 = vmatprep.subr.bf16.mxu0 0
    %1747 = vmatpush1.bf16.xpose.msra.mxu0 0
    %1748 = vmatprep.subr.bf16.mxu0 0
    %1749 = vmatpush1.bf16.xpose.msra.mxu0 0
    %1750 = vmatprep.subr.bf16.mxu0 0
    %1751 = vmatpush1.bf16.xpose.msra.mxu0 0
    %1752 = vmatprep.subr.bf16.mxu0 0
    %1753 = vmatpush1.bf16.xpose.msra.mxu0 0
    %1754 = vmatprep.subr.bf16.mxu0 0
    %1755 = vmatpush1.bf16.xpose.msra.mxu0 0
    %1756 = vmatprep.subr.bf16.mxu0 0
    %1757 = vmatpush1.bf16.xpose.msra.mxu0 0
    %1758 = vmatprep.subr.bf16.mxu0 0
    %1759 = vmatpush1.bf16.xpose.msra.mxu0 0
    %1760 = vmatprep.subr.bf16.mxu0 0
    %1761 = vmatpush1.bf16.xpose.msra.mxu0 0
    %1762 = vmatprep.subr.bf16.mxu0 0
    %1763 = vmatpush1.bf16.xpose.msra.mxu0 0
    %1764 = vmatprep.subr.bf16.mxu0 0
    %1765 = vmatpush1.bf16.xpose.msra.mxu0 0
    %1766 = vmatprep.subr.bf16.mxu0 0
    %1767 = vmatpush1.bf16.xpose.msra.mxu0 0
    %1768 = vmatprep.subr.bf16.mxu0 0
    %1769 = vmatpush1.bf16.xpose.msra.mxu0 0
    %1770 = vmatprep.subr.bf16.mxu0 0
    %1771 = vmatpush1.bf16.xpose.msra.mxu0 0
    %1772 = vmatprep.mubr.bf16.mxu0 0
    %1773 = vmatmul.mubr.bf16.gmra.mrb[0].mxu0 %v1732
    %v1774 = vpop.f32.mrb[0].mxu0
    %v1775 = vadd.f32 0.0, %v1774
    %v1776 = vpop.f32.mrb[0].mxu0
    %v1777 = vpop.f32.mrb[0].mxu0
    %v1778 = vadd.f32 0.0, %v1777
    %v1779 = vpop.f32.mrb[0].mxu0
    %1780 = vdwg.mxu0
    %v1781 = vadd.f32 %v1603, %v1775
    %v1782 = vadd.f32 %v1604, %v1778
    %v1783 = vadd.f32 %v1781, %v1068
    %v1784 = vadd.f32 %v1782, %v1069
    %v1785 = vadd.f32 %v41, %v1783
    %v1786 = vadd.f32 %v42, %v1784
    %v1787 = vld [vmem:[%s7 + $0x80] sm:$0xff]
    %v1788 = vld [vmem:[%s7 + $0x88] sm:$0xff]
    %v1789 = vld [vmem:[%s7 + $0x90] sm:$0xff]
    %v1790 = vld [vmem:[%s7 + $0x98] sm:$0xff]
    %v1791 = vsel %vm66, %v1785, 0.0
    %1792 = vadd.xlane.f32.xlu0 %v1791
    %v1793 = vpop.xlane.xlu0 %1792
    %v1794 = vsel %vm66, %v1786, 0.0
    %1795 = vadd.xlane.f32.xlu0 %v1794
    %v1796 = vpop.xlane.xlu0 %1795
    %v1797 = vmul.f32 %v1793, %v909
    %v1798 = vmul.f32 %v1796, %v909
    %v1799 = vmul.f32 %v1785, %v1785
    %v1800 = vmul.f32 %v1786, %v1786
    %v1801 = vsel %vm66, %v1799, 0.0
    %1802 = vadd.xlane.f32.xlu0 %v1801
    %v1803 = vpop.xlane.xlu0 %1802
    %v1804 = vsel %vm66, %v1800, 0.0
    %1805 = vadd.xlane.f32.xlu0 %v1804
    %v1806 = vpop.xlane.xlu0 %1805
    %v1807 = vmul.f32 %v1803, %v909
    %v1808 = vmul.f32 %v1806, %v909
    %v1809 = vmul.f32 %v1797, %v1797
    %v1810 = vmul.f32 %v1798, %v1798
    %v1811 = vsub.f32 %v1807, %v1809
    %v1812 = vsub.f32 %v1808, %v1810
    %v1813 = vadd.f32 %v1811, 1e-05
    %v1814 = vadd.f32 %v1812, 1e-05
    %v1815 = vrsqrt.pop %v1813
    %v1816 = vrsqrt.pop %v1814
    %v1817 = vsub.f32 %v1785, %v1797
    %v1818 = vsub.f32 %v1786, %v1798
    %v1819 = vmul.f32 %v1787, %v1815
    %v1820 = vmul.f32 %v1788, %v1816
    %v1821 = vmul.f32 %v1817, %v1819
    %v1822 = vmul.f32 %v1818, %v1820
    %v1823 = vadd.f32 %v1821, %v1789
    %v1824 = vadd.f32 %v1822, %v1790
    %v1825 = vld [vmem:[%s6 + $0x60] sm:$0xf]
    %v1826 = vld [vmem:[%s6 + $0x64] sm:$0xf]
    %v1827 = vld [vmem:[%s6 + $0x68] sm:$0xf]
    %v1828 = vld [vmem:[%s6 + $0x6c] sm:$0xf]
    %v1829 = vpack.c.bf16 %v1824, %v1823
    %v1830 = vld [vmem:[%s7 + $0xa0] sm:$0xff]
    %v1831 = vld [vmem:[%s7 + $0xa8] sm:$0xff]
    %v1836 = vunpack.c.l.b16 %v1825
    %v1837 = vunpack.c.l.b16 %v1826
    %v1838 = vunpack.c.l.b16 %v1827
    %v1839 = vunpack.c.l.b16 %v1828
    %v1840 = vpack.c.b16 %v1837, %v1836
    %v1841 = vpack.c.b16 %v1839, %v1838
    %v1845 = vsel %vm66, %v1829, 0
    %1847 = vmatprep.subr.bf16.mxu0 0
    %1848 = vmatpush1.bf16.msra.mxu0 %v1840
    %1849 = vmatprep.subr.bf16.mxu0 0
    %1850 = vmatpush1.bf16.msra.mxu0 %v1841
    %1851 = vmatprep.subr.bf16.mxu0 0
    %1852 = vmatpush1.bf16.msra.mxu0 0
    %1853 = vmatprep.subr.bf16.mxu0 0
    %1854 = vmatpush1.bf16.msra.mxu0 0
    %1855 = vmatprep.subr.bf16.mxu0 0
    %1856 = vmatpush1.bf16.msra.mxu0 0
    %1857 = vmatprep.subr.bf16.mxu0 0
    %1858 = vmatpush1.bf16.msra.mxu0 0
    %1859 = vmatprep.subr.bf16.mxu0 0
    %1860 = vmatpush1.bf16.msra.mxu0 0
    %1861 = vmatprep.subr.bf16.mxu0 0
    %1862 = vmatpush1.bf16.msra.mxu0 0
    %1863 = vmatprep.subr.bf16.mxu0 0
    %1864 = vmatpush1.bf16.msra.mxu0 0
    %1865 = vmatprep.subr.bf16.mxu0 0
    %1866 = vmatpush1.bf16.msra.mxu0 0
    %1867 = vmatprep.subr.bf16.mxu0 0
    %1868 = vmatpush1.bf16.msra.mxu0 0
    %1869 = vmatprep.subr.bf16.mxu0 0
    %1870 = vmatpush1.bf16.msra.mxu0 0
    %1871 = vmatprep.subr.bf16.mxu0 0
    %1872 = vmatpush1.bf16.msra.mxu0 0
    %1873 = vmatprep.subr.bf16.mxu0 0
    %1874 = vmatpush1.bf16.msra.mxu0 0
    %1875 = vmatprep.subr.bf16.mxu0 0
    %1876 = vmatpush1.bf16.msra.mxu0 0
    %1877 = vmatprep.subr.bf16.mxu0 0
    %1878 = vmatpush1.bf16.msra.mxu0 0
    %1879 = vmatprep.mubr.bf16.mxu0 0
    %1880 = vmatmul.mubr.bf16.gmra.mrb[0].mxu0 %v1845
    %v1881 = vpop.f32.mrb[0].mxu0
    %v1882 = vadd.f32 %v1830, %v1881
    %v1883 = vpop.f32.mrb[0].mxu0
    %v1884 = vpop.f32.mrb[0].mxu0
    %v1885 = vadd.f32 %v1831, %v1884
    %v1886 = vpop.f32.mrb[0].mxu0
    %1887 = vdwg.mxu0
    %v1888 = vmax.f32 %v1882, 0.0
    %v1889 = vmax.f32 %v1885, 0.0
    %v1890 = vld [vmem:[%s6 + $0x70] sm:$0xf]
    %v1891 = vld [vmem:[%s6 + $0x74] sm:$0xf]
    %v1892 = vld [vmem:[%s6 + $0x78] sm:$0xf]
    %v1893 = vld [vmem:[%s6 + $0x7c] sm:$0xf]
    %v1894 = vld [vmem:[%s6 + $0x80] sm:$0xf]
    %v1895 = vld [vmem:[%s6 + $0x84] sm:$0xf]
    %v1896 = vld [vmem:[%s6 + $0x88] sm:$0xf]
    %v1897 = vld [vmem:[%s6 + $0x8c] sm:$0xf]
    %v1898 = vpack.c.bf16 %v1889, %v1888
    %v1899 = vld [vmem:[%s7 + $0xb0] sm:$0xff]
    %v1900 = vld [vmem:[%s7 + $0xb8] sm:$0xff]
    %v1909 = vunpack.c.l.b16 %v1890
    %v1910 = vunpack.c.l.b16 %v1891
    %v1911 = vunpack.c.l.b16 %v1892
    %v1912 = vunpack.c.l.b16 %v1893
    %v1913 = vunpack.c.l.b16 %v1894
    %v1914 = vunpack.c.l.b16 %v1895
    %v1915 = vunpack.c.l.b16 %v1896
    %v1916 = vunpack.c.l.b16 %v1897
    %v1917 = vpack.c.b16 %v1910, %v1909
    %v1918 = vpack.c.b16 %v1912, %v1911
    %v1919 = vpack.c.b16 %v1914, %v1913
    %v1920 = vpack.c.b16 %v1916, %v1915
    %vm1925 = vcmask 523264
    %v1927 = vsel %vm1925, %v1898, 0
    %1929 = vmatprep.subr.bf16.mxu0 0
    %1930 = vmatpush1.bf16.msra.mxu0 %v1917
    %1931 = vmatprep.subr.bf16.mxu0 0
    %1932 = vmatpush1.bf16.msra.mxu0 %v1918
    %1933 = vmatprep.subr.bf16.mxu0 0
    %1934 = vmatpush1.bf16.msra.mxu0 %v1919
    %1935 = vmatprep.subr.bf16.mxu0 0
    %1936 = vmatpush1.bf16.msra.mxu0 %v1920
    %1937 = vmatprep.subr.bf16.mxu0 0
    %1938 = vmatpush1.bf16.msra.mxu0 0
    %1939 = vmatprep.subr.bf16.mxu0 0
    %1940 = vmatpush1.bf16.msra.mxu0 0
    %1941 = vmatprep.subr.bf16.mxu0 0
    %1942 = vmatpush1.bf16.msra.mxu0 0
    %1943 = vmatprep.subr.bf16.mxu0 0
    %1944 = vmatpush1.bf16.msra.mxu0 0
    %1945 = vmatprep.subr.bf16.mxu0 0
    %1946 = vmatpush1.bf16.msra.mxu0 0
    %1947 = vmatprep.subr.bf16.mxu0 0
    %1948 = vmatpush1.bf16.msra.mxu0 0
    %1949 = vmatprep.subr.bf16.mxu0 0
    %1950 = vmatpush1.bf16.msra.mxu0 0
    %1951 = vmatprep.subr.bf16.mxu0 0
    %1952 = vmatpush1.bf16.msra.mxu0 0
    %1953 = vmatprep.subr.bf16.mxu0 0
    %1954 = vmatpush1.bf16.msra.mxu0 0
    %1955 = vmatprep.subr.bf16.mxu0 0
    %1956 = vmatpush1.bf16.msra.mxu0 0
    %1957 = vmatprep.subr.bf16.mxu0 0
    %1958 = vmatpush1.bf16.msra.mxu0 0
    %1959 = vmatprep.subr.bf16.mxu0 0
    %1960 = vmatpush1.bf16.msra.mxu0 0
    %1961 = vmatprep.mubr.bf16.mxu0 0
    %1962 = vmatmul.mubr.bf16.gmra.mrb[0].mxu0 %v1927
    %v1963 = vpop.f32.mrb[0].mxu0
    %v1964 = vadd.f32 %v1899, %v1963
    %v1965 = vpop.f32.mrb[0].mxu0
    %v1966 = vpop.f32.mrb[0].mxu0
    %v1967 = vadd.f32 %v1900, %v1966
    %v1968 = vpop.f32.mrb[0].mxu0
    %1969 = vdwg.mxu0
    %v1970 = vadd.f32 %v1823, %v1964
    %v1971 = vadd.f32 %v1824, %v1967
    %v1972 = vld [vmem:[%s7 + $0xc0] sm:$0xff]
    %v1973 = vld [vmem:[%s7 + $0xc8] sm:$0xff]
    %v1974 = vld [vmem:[%s7 + $0xd0] sm:$0xff]
    %v1975 = vld [vmem:[%s7 + $0xd8] sm:$0xff]
    %v1976 = vsel %vm66, %v1970, 0.0
    %1977 = vadd.xlane.f32.xlu0 %v1976
    %v1978 = vpop.xlane.xlu0 %1977
    %v1979 = vsel %vm66, %v1971, 0.0
    %1980 = vadd.xlane.f32.xlu0 %v1979
    %v1981 = vpop.xlane.xlu0 %1980
    %v1982 = vmul.f32 %v1978, %v909
    %v1983 = vmul.f32 %v1981, %v909
    %v1984 = vmul.f32 %v1970, %v1970
    %v1985 = vmul.f32 %v1971, %v1971
    %v1986 = vsel %vm66, %v1984, 0.0
    %1987 = vadd.xlane.f32.xlu0 %v1986
    %v1988 = vpop.xlane.xlu0 %1987
    %v1989 = vsel %vm66, %v1985, 0.0
    %1990 = vadd.xlane.f32.xlu0 %v1989
    %v1991 = vpop.xlane.xlu0 %1990
    %v1992 = vmul.f32 %v1988, %v909
    %v1993 = vmul.f32 %v1991, %v909
    %v1994 = vmul.f32 %v1982, %v1982
    %v1995 = vmul.f32 %v1983, %v1983
    %v1996 = vsub.f32 %v1992, %v1994
    %v1997 = vsub.f32 %v1993, %v1995
    %v1998 = vadd.f32 %v1996, 1e-05
    %v1999 = vadd.f32 %v1997, 1e-05
    %v2000 = vrsqrt.pop %v1998
    %v2001 = vrsqrt.pop %v1999
    %v2002 = vsub.f32 %v1970, %v1982
    %v2003 = vsub.f32 %v1971, %v1983
    %v2004 = vmul.f32 %v1972, %v2000
    %v2005 = vmul.f32 %v1973, %v2001
    %v2006 = vmul.f32 %v2002, %v2004
    %v2007 = vmul.f32 %v2003, %v2005
    %v2008 = vadd.f32 %v2006, %v1974
    %v2009 = vadd.f32 %v2007, %v1975
    %2010 = vst.msk [vmem:[#allocation2] sm:$0xff] %vm66, %v2008
    %2011 = vst.msk [vmem:[#allocation2 + $0x8] sm:$0xff] %vm66, %v2009
    // Predicated region
    $region34: #{transformer_decoder_layer_stacked.1} parent=1 // pred_check
      _
    $region35: #{transformer_decoder_layer_stacked.1} parent=1 // pred_check_branch
      %2013 = sbr.rel (0) target = $region37
    $region36: #{transformer_decoder_layer_stacked.1} parent=1 // pred_region
      %s2015 = ssub.s32 256, 256
      %2016 = vsyncadd [#allocation3], %s2015
      %s2017 = sshll.u32 [#allocation2], 4
      %s2018 = int_to_ptr.vmem [resolvable:$true] %s2017
      %2023 = dma.vmem_to_hbm [thread:$0]  %s2018, 256, %s8, [#allocation3], 128, 128, 8
    $region37: #{transformer_decoder_layer_stacked.1} parent=1 // pred_fallthru
      _
    // Predicated region
    $region38: #{transformer_decoder_layer_stacked.1} parent=1 // pred_check
      _
    $region39: #{transformer_decoder_layer_stacked.1} parent=1 // pred_check_branch
      %2025 = sbr.rel (0) target = $region41
    $region40: #{transformer_decoder_layer_stacked.1} parent=1 // pred_region
      %2026 = dma.done [#allocation3], 256
    $region41: #{transformer_decoder_layer_stacked.1} parent=1 // pred_fallthru
      _
    %2027 = vsyncpa [#allocation3], 1

</llo_original>
